<compile_context>
chip_gen: v7x
topology: tpu7x:2x2x1
jax: 0.10.0
libtpu: 0.0.40
codegen_flags: <defaults>
</compile_context>

<pallas_src>
import functools

import jax
import jax.numpy as jnp
import numpy as np
from jax.experimental import pallas as pl
from jax.experimental.pallas import tpu as pltpu


def _round_up(n, m):
    return (n + m - 1) // m * m


# ------------------------------ Pallas kernel -------------------------------

def _inception_kernel(x_ref, col_ref, wf_ref, bf_ref, w4_ref, b4_ref,
                      w2b_ref, b2b_ref, w3b_ref, b3b_ref,
                      o_ref,
                      xpad_ref, pad2_ref, pad3_ref, cols2_ref, cols3_ref,
                      *, c1, c2a, c3a, H, W, base1, base2):
    f32 = jnp.float32
    M = H * W
    Cin = x_ref.shape[0]
    cdt = xpad_ref.dtype
    odt = o_ref.dtype

    x = x_ref[...]                                    # (Cin, M), compute dtype
    col = col_ref[...]                                # (1, M) int32 : m % W

    # Lane-validity masks for horizontal (dx) shifts.  Vertical (dy) shifts
    # are handled by the zero / -inf padding rows of the flat scratch.
    masks = {dx: (col + dx >= 0) & (col + dx < W) for dx in (-2, -1, 1, 2)}

    # ---- fused 1x1 convs over x: [branch1 | branch2-reduce | branch3-reduce]
    f = jnp.dot(wf_ref[...], x, preferred_element_type=f32) + bf_ref[...]
    o_ref[:c1, :] = jnp.maximum(f[:c1, :], 0.0).astype(odt)   # branch 1 (ReLU)
    p2a = f[c1:c1 + c2a, :]                           # no ReLU (matches module)
    p3a = f[c1 + c2a:, :]                             # no ReLU (matches module)

    # ---- branch 4: 3x3 max-pool (stride 1, pad 1, -inf pad) + 1x1 conv + ReLU
    xpad_ref[:, :base1] = jnp.full((Cin, base1), -jnp.inf, cdt)
    xpad_ref[:, base1 + M:] = jnp.full((Cin, base1), -jnp.inf, cdt)
    xpad_ref[:, base1:base1 + M] = x
    m = None
    for ky in range(3):
        for kx in range(3):
            s = base1 + (ky - 1) * W + (kx - 1)
            piece = xpad_ref[:, s:s + M]
            dx = kx - 1
            if dx != 0:
                piece = jnp.where(masks[dx], piece, -jnp.inf)
            m = piece if m is None else jnp.maximum(m, piece)
    p4 = jnp.dot(w4_ref[...], m, preferred_element_type=f32) + b4_ref[...]
    c2b = w2b_ref.shape[0]
    c3b = w3b_ref.shape[0]
    o_ref[c1 + c2b + c3b:, :] = jnp.maximum(p4, 0.0).astype(odt)

    # ---- branch 2: 3x3 conv (zero pad 1) on p2a as ONE (c2b,9*c2a)x(9*c2a,M) matmul
    z2 = jnp.zeros((c2a, base1), cdt)
    pad2_ref[:, :base1] = z2
    pad2_ref[:, base1 + M:] = z2
    pad2_ref[:, base1:base1 + M] = p2a.astype(cdt)
    for ky in range(3):
        for kx in range(3):
            s = base1 + (ky - 1) * W + (kx - 1)
            piece = pad2_ref[:, s:s + M]
            dx = kx - 1
            if dx != 0:
                piece = jnp.where(masks[dx], piece, 0.0)
            t = ky * 3 + kx
            cols2_ref[t * c2a:(t + 1) * c2a, :] = piece
    p2 = jnp.dot(w2b_ref[...], cols2_ref[...], preferred_element_type=f32) + b2b_ref[...]
    o_ref[c1:c1 + c2b, :] = jnp.maximum(p2, 0.0).astype(odt)

    # ---- branch 3: 5x5 conv (zero pad 2) on p3a as ONE (c3b,25*c3a)x(25*c3a,M) matmul
    z3 = jnp.zeros((c3a, base2), cdt)
    pad3_ref[:, :base2] = z3
    pad3_ref[:, base2 + M:] = z3
    pad3_ref[:, base2:base2 + M] = p3a.astype(cdt)
    for ky in range(5):
        for kx in range(5):
            s = base2 + (ky - 2) * W + (kx - 2)
            piece = pad3_ref[:, s:s + M]
            dx = kx - 2
            if dx != 0:
                piece = jnp.where(masks[dx], piece, 0.0)
            t = ky * 5 + kx
            cols3_ref[t * c3a:(t + 1) * c3a, :] = piece
    p3 = jnp.dot(w3b_ref[...], cols3_ref[...], preferred_element_type=f32) + b3b_ref[...]
    o_ref[c1 + c2b:c1 + c2b + c3b, :] = jnp.maximum(p3, 0.0).astype(odt)


# --------------------------------- wrapper -----------------------------------

def inception_block(x_nchw, p, *, compute_dtype=jnp.float32):
    """Fused Inception block (NCHW in, NCHW out).  compute_dtype=jnp.bfloat16
    recommended on v6e/v7x (f32 accumulation + f32 epilogue kept)."""
    f32 = jnp.float32
    N, Cin, H, W = x_nchw.shape
    M = H * W

    c1 = p['w1'].shape[-1]
    c2a, c2b = p['w2b'].shape[2], p['w2b'].shape[3]
    c3a, c3b = p['w3b'].shape[2], p['w3b'].shape[3]
    c4 = p['w4'].shape[-1]
    Ctot = c1 + c2b + c3b + c4

    # Pad the 1x1 "reduce" channel counts up to a sublane multiple (8) with
    # zero weights/biases so every in-kernel row-block is sublane-aligned.
    c2a_p = _round_up(c2a, 8)
    c3a_p = _round_up(c3a, 8)

    w1 = p['w1'].reshape(Cin, c1)
    w2a = jnp.pad(p['w2a'].reshape(Cin, c2a), ((0, 0), (0, c2a_p - c2a)))
    w3a = jnp.pad(p['w3a'].reshape(Cin, c3a), ((0, 0), (0, c3a_p - c3a)))
    wf_t = jnp.concatenate([w1, w2a, w3a], axis=-1).T.astype(compute_dtype)
    bf = jnp.concatenate([p['b1'],
                          jnp.pad(p['b2a'], (0, c2a_p - c2a)),
                          jnp.pad(p['b3a'], (0, c3a_p - c3a))]).reshape(-1, 1).astype(f32)

    w4_t = p['w4'].reshape(Cin, c4).T.astype(compute_dtype)
    b4 = p['b4'].reshape(-1, 1).astype(f32)

    # HWIO -> (Cout, tap*Cin_reduce)  (tap-major, channel-minor), padded reduce dim.
    w2b = jnp.pad(p['w2b'], ((0, 0), (0, 0), (0, c2a_p - c2a), (0, 0)))
    w2b_mat = (w2b.reshape(9, c2a_p, c2b).transpose(2, 0, 1)
               .reshape(c2b, 9 * c2a_p).astype(compute_dtype))
    b2b = p['b2b'].reshape(-1, 1).astype(f32)

    w3b = jnp.pad(p['w3b'], ((0, 0), (0, 0), (0, c3a_p - c3a), (0, 0)))
    w3b_mat = (w3b.reshape(25, c3a_p, c3b).transpose(2, 0, 1)
               .reshape(c3b, 25 * c3a_p).astype(compute_dtype))
    b3b = p['b3b'].reshape(-1, 1).astype(f32)

    # NCHW -> (N, Cin, H*W): free metadata-only reshape; no transpose / HBM pad.
    x = x_nchw.reshape(N, Cin, M).astype(compute_dtype)
    col_idx = (jnp.arange(M, dtype=jnp.int32) % W).reshape(1, M)

    # Lane-aligned flat-pad offsets (>= r*(W+1), rounded to 128 so the interior
    # writes and border zeroing are full-vreg stores).
    base1 = _round_up(W + 1, 128)       # 3x3 conv / 3x3 pool (radius 1)
    base2 = _round_up(2 * W + 2, 128)   # 5x5 conv (radius 2)

    cfused = c1 + c2a_p + c3a_p
    kernel = functools.partial(_inception_kernel, c1=c1, c2a=c2a_p, c3a=c3a_p,
                               H=H, W=W, base1=base1, base2=base2)

    itemsize = jnp.dtype(compute_dtype).itemsize
    flops = 2 * N * M * (Cin * (cfused + c4)
                         + 9 * c2a_p * c2b + 25 * c3a_p * c3b)
    bytes_accessed = (N * Cin * M * itemsize + N * Ctot * M * 4 + M * 4
                      + (wf_t.size + w4_t.size + w2b_mat.size + w3b_mat.size) * itemsize
                      + (bf.size + b4.size + b2b.size + b3b.size) * 4)

    out = pl.pallas_call(
        kernel,
        out_shape=jax.ShapeDtypeStruct((N, Ctot, M), jnp.float32),
        grid=(N,),
        in_specs=[
            pl.BlockSpec((None, Cin, M), lambda i: (i, 0, 0)),     # x (C, M)
            pl.BlockSpec((1, M), lambda i: (0, 0)),                # column index m % W
            pl.BlockSpec((cfused, Cin), lambda i: (0, 0)),         # fused 1x1 W^T
            pl.BlockSpec((cfused, 1), lambda i: (0, 0)),           # fused 1x1 bias
            pl.BlockSpec((c4, Cin), lambda i: (0, 0)),             # branch-4 1x1 W^T
            pl.BlockSpec((c4, 1), lambda i: (0, 0)),
            pl.BlockSpec((c2b, 9 * c2a_p), lambda i: (0, 0)),      # 3x3 weights
            pl.BlockSpec((c2b, 1), lambda i: (0, 0)),
            pl.BlockSpec((c3b, 25 * c3a_p), lambda i: (0, 0)),     # 5x5 weights
            pl.BlockSpec((c3b, 1), lambda i: (0, 0)),
        ],
        out_specs=pl.BlockSpec((None, Ctot, M), lambda i: (i, 0, 0)),
        scratch_shapes=[
            pltpu.VMEM((Cin, M + 2 * base1), compute_dtype),       # -inf padded x
            pltpu.VMEM((c2a_p, M + 2 * base1), compute_dtype),     # zero padded p2a
            pltpu.VMEM((c3a_p, M + 2 * base2), compute_dtype),     # zero padded p3a
            pltpu.VMEM((9 * c2a_p, M), compute_dtype),             # 3x3 column block
            pltpu.VMEM((25 * c3a_p, M), compute_dtype),            # 5x5 column block
        ],
        compiler_params=pltpu.CompilerParams(
            dimension_semantics=("parallel",)),
        cost_estimate=pl.CostEstimate(flops=flops, transcendentals=0,
                                      bytes_accessed=bytes_accessed),
    )(x, col_idx, wf_t, bf, w4_t, b4, w2b_mat, b2b, w3b_mat, b3b)

    return out.reshape(N, Ctot, H, W)                 # still NCHW, free reshape


def init_params(key, cin, c1, c2, c3, c4):
    ks = jax.random.split(key, 12)

    def w(k, shape):
        return 0.1 * jax.random.normal(k, shape, jnp.float32)

    def b(k, n):
        return 0.05 * jax.random.normal(k, (n,), jnp.float32)

    return {
        'w1':  w(ks[0], (1, 1, cin, c1)),      'b1':  b(ks[1], c1),
        'w2a': w(ks[2], (1, 1, cin, c2[0])),   'b2a': b(ks[3], c2[0]),
        'w2b': w(ks[4], (3, 3, c2[0], c2[1])), 'b2b': b(ks[5], c2[1]),
        'w3a': w(ks[6], (1, 1, cin, c3[0])),   'b3a': b(ks[7], c3[0]),
        'w3b': w(ks[8], (5, 5, c3[0], c3[1])), 'b3b': b(ks[9], c3[1]),
        'w4':  w(ks[10], (1, 1, cin, c4)),     'b4':  b(ks[11], c4),
    }


# ----------------------- pure-JAX reference (checking) ----------------------

def _conv_ref(x, w, b, pad):
    out = jax.lax.conv_general_dilated(
        x, w, (1, 1), [(pad, pad), (pad, pad)],
        dimension_numbers=('NHWC', 'HWIO', 'NHWC'))
    return out + b.reshape(1, 1, 1, -1)


def inception_ref(x_nchw, p):
    x = jnp.transpose(x_nchw, (0, 2, 3, 1))
    r = jax.nn.relu
    p1 = r(_conv_ref(x, p['w1'], p['b1'], 0))
    p2 = r(_conv_ref(_conv_ref(x, p['w2a'], p['b2a'], 0), p['w2b'], p['b2b'], 1))
    p3 = r(_conv_ref(_conv_ref(x, p['w3a'], p['b3a'], 0), p['w3b'], p['b3b'], 2))
    pooled = jax.lax.reduce_window(
        x, -jnp.inf, jax.lax.max, (1, 3, 3, 1), (1, 1, 1, 1),
        [(0, 0), (1, 1), (1, 1), (0, 0)])
    p4 = r(_conv_ref(pooled, p['w4'], p['b4'], 0))
    out = jnp.concatenate([p1, p2, p3, p4], axis=-1)
    return jnp.transpose(out, (0, 3, 1, 2))


# --------------------------------- main --------------------------------------

if __name__ == "__main__":
    key = jax.random.PRNGKey(0)
    kx, kp = jax.random.split(key)

    N, Cin, H, W = 2, 4, 16, 16
    c1, c2, c3, c4 = 8, (8, 16), (4, 8), 8

    x = jax.random.normal(kx, (N, Cin, H, W), jnp.float32)
    params = init_params(kp, Cin, c1, c2, c3, c4)

    out = jax.jit(inception_block)(x, params)
    out = jax.block_until_ready(out)

    expected_shape = (N, c1 + c2[1] + c3[1] + c4, H, W)
    assert out.shape == expected_shape, (out.shape, expected_shape)

    ref = inception_ref(x, params)
    np.testing.assert_allclose(np.asarray(out), np.asarray(ref),
                               rtol=1e-4, atol=1e-4)
    print("KERNEL_OK")
</pallas_src>

<mosaic_0001>
module attributes {stable_mosaic.version = 11 : i64} {
  func.func @_inception_kernel(%arg0: i32, %arg1: memref<1x4x256xf32, #tpu.memory_space<vmem>>, %arg2: memref<1x256xi32, #tpu.memory_space<vmem>>, %arg3: memref<24x4xf32, #tpu.memory_space<vmem>>, %arg4: memref<24x1xf32, #tpu.memory_space<vmem>>, %arg5: memref<8x4xf32, #tpu.memory_space<vmem>>, %arg6: memref<8x1xf32, #tpu.memory_space<vmem>>, %arg7: memref<16x72xf32, #tpu.memory_space<vmem>>, %arg8: memref<16x1xf32, #tpu.memory_space<vmem>>, %arg9: memref<8x200xf32, #tpu.memory_space<vmem>>, %arg10: memref<8x1xf32, #tpu.memory_space<vmem>>, %arg11: memref<1x40x256xf32, #tpu.memory_space<vmem>>, %arg12: memref<4x512xf32, #tpu.memory_space<vmem>>, %arg13: memref<8x512xf32, #tpu.memory_space<vmem>>, %arg14: memref<8x512xf32, #tpu.memory_space<vmem>>, %arg15: memref<72x256xf32, #tpu.memory_space<vmem>>, %arg16: memref<200x256xf32, #tpu.memory_space<vmem>>) attributes {dimension_semantics = [#tpu.dimension_semantics<parallel>], iteration_bounds = array<i64: 2>, scalar_prefetch = 0 : i64, scratch_operands = 5 : i64, tpu.core_type = #tpu.core_type<tc>, window_params = [{transform_indices = @transform_0, window_bounds = array<i64: 1, 4, 256>}, {pipeline_mode = #tpu.pipeline_mode<synchronous>, transform_indices = @transform_1, window_bounds = array<i64: 1, 256>}, {pipeline_mode = #tpu.pipeline_mode<synchronous>, transform_indices = @transform_2, window_bounds = array<i64: 24, 4>}, {pipeline_mode = #tpu.pipeline_mode<synchronous>, transform_indices = @transform_3, window_bounds = array<i64: 24, 1>}, {pipeline_mode = #tpu.pipeline_mode<synchronous>, transform_indices = @transform_4, window_bounds = array<i64: 8, 4>}, {pipeline_mode = #tpu.pipeline_mode<synchronous>, transform_indices = @transform_5, window_bounds = array<i64: 8, 1>}, {pipeline_mode = #tpu.pipeline_mode<synchronous>, transform_indices = @transform_6, window_bounds = array<i64: 16, 72>}, {pipeline_mode = #tpu.pipeline_mode<synchronous>, transform_indices = @transform_7, window_bounds = array<i64: 16, 1>}, {pipeline_mode = #tpu.pipeline_mode<synchronous>, transform_indices = @transform_8, window_bounds = array<i64: 8, 200>}, {pipeline_mode = #tpu.pipeline_mode<synchronous>, transform_indices = @transform_9, window_bounds = array<i64: 8, 1>}, {transform_indices = @transform_10, window_bounds = array<i64: 1, 40, 256>}]} {
    %c0 = arith.constant 0 : index
    %c0_0 = arith.constant 0 : index
    %c0_1 = arith.constant 0 : index
    %0 = vector.load %arg1[%c0, %c0_0, %c0_1] : memref<1x4x256xf32, #tpu.memory_space<vmem>>, vector<1x4x256xf32>
    %1 = vector.shape_cast %0 : vector<1x4x256xf32> to vector<4x256xf32>
    %c0_2 = arith.constant 0 : index
    %c0_3 = arith.constant 0 : index
    %2 = vector.load %arg2[%c0_2, %c0_3] : memref<1x256xi32, #tpu.memory_space<vmem>>, vector<1x256xi32>
    %c-2_i32 = arith.constant -2 : i32
    %3 = vector.broadcast %c-2_i32 : i32 to vector<1x256xi32>
    %4 = arith.addi %2, %3 : vector<1x256xi32>
    %c0_i32 = arith.constant 0 : i32
    %5 = vector.broadcast %c0_i32 : i32 to vector<1x256xi32>
    %6 = arith.cmpi sge, %4, %5 : vector<1x256xi32>
    %c-2_i32_4 = arith.constant -2 : i32
    %7 = vector.broadcast %c-2_i32_4 : i32 to vector<1x256xi32>
    %8 = arith.addi %2, %7 : vector<1x256xi32>
    %c16_i32 = arith.constant 16 : i32
    %9 = vector.broadcast %c16_i32 : i32 to vector<1x256xi32>
    %10 = arith.cmpi slt, %8, %9 : vector<1x256xi32>
    %11 = arith.andi %6, %10 : vector<1x256xi1>
    %c-1_i32 = arith.constant -1 : i32
    %12 = vector.broadcast %c-1_i32 : i32 to vector<1x256xi32>
    %13 = arith.addi %2, %12 : vector<1x256xi32>
    %c0_i32_5 = arith.constant 0 : i32
    %14 = vector.broadcast %c0_i32_5 : i32 to vector<1x256xi32>
    %15 = arith.cmpi sge, %13, %14 : vector<1x256xi32>
    %c-1_i32_6 = arith.constant -1 : i32
    %16 = vector.broadcast %c-1_i32_6 : i32 to vector<1x256xi32>
    %17 = arith.addi %2, %16 : vector<1x256xi32>
    %c16_i32_7 = arith.constant 16 : i32
    %18 = vector.broadcast %c16_i32_7 : i32 to vector<1x256xi32>
    %19 = arith.cmpi slt, %17, %18 : vector<1x256xi32>
    %20 = arith.andi %15, %19 : vector<1x256xi1>
    %c1_i32 = arith.constant 1 : i32
    %21 = vector.broadcast %c1_i32 : i32 to vector<1x256xi32>
    %22 = arith.addi %2, %21 : vector<1x256xi32>
    %c0_i32_8 = arith.constant 0 : i32
    %23 = vector.broadcast %c0_i32_8 : i32 to vector<1x256xi32>
    %24 = arith.cmpi sge, %22, %23 : vector<1x256xi32>
    %c1_i32_9 = arith.constant 1 : i32
    %25 = vector.broadcast %c1_i32_9 : i32 to vector<1x256xi32>
    %26 = arith.addi %2, %25 : vector<1x256xi32>
    %c16_i32_10 = arith.constant 16 : i32
    %27 = vector.broadcast %c16_i32_10 : i32 to vector<1x256xi32>
    %28 = arith.cmpi slt, %26, %27 : vector<1x256xi32>
    %29 = arith.andi %24, %28 : vector<1x256xi1>
    %c2_i32 = arith.constant 2 : i32
    %30 = vector.broadcast %c2_i32 : i32 to vector<1x256xi32>
    %31 = arith.addi %2, %30 : vector<1x256xi32>
    %c0_i32_11 = arith.constant 0 : i32
    %32 = vector.broadcast %c0_i32_11 : i32 to vector<1x256xi32>
    %33 = arith.cmpi sge, %31, %32 : vector<1x256xi32>
    %c2_i32_12 = arith.constant 2 : i32
    %34 = vector.broadcast %c2_i32_12 : i32 to vector<1x256xi32>
    %35 = arith.addi %2, %34 : vector<1x256xi32>
    %c16_i32_13 = arith.constant 16 : i32
    %36 = vector.broadcast %c16_i32_13 : i32 to vector<1x256xi32>
    %37 = arith.cmpi slt, %35, %36 : vector<1x256xi32>
    %38 = arith.andi %33, %37 : vector<1x256xi1>
    %c0_14 = arith.constant 0 : index
    %c0_15 = arith.constant 0 : index
    %39 = vector.load %arg3[%c0_14, %c0_15] : memref<24x4xf32, #tpu.memory_space<vmem>>, vector<24x4xf32>
    %cst = arith.constant dense<0.000000e+00> : vector<24x256xf32>
    %40 = tpu.matmul %39, %1, %cst {dimension_numbers = #tpu.dot_dimension_numbers<[1], [0], [0], [1], [0, 0, 1, 1], [], []>} : vector<24x4xf32>, vector<4x256xf32>, vector<24x256xf32> -> vector<24x256xf32>
    %c0_16 = arith.constant 0 : index
    %c0_17 = arith.constant 0 : index
    %41 = vector.load %arg4[%c0_16, %c0_17] : memref<24x1xf32, #tpu.memory_space<vmem>>, vector<24x1xf32>
    %42 = vector.broadcast %41 : vector<24x1xf32> to vector<24x256xf32>
    %43 = arith.addf %40, %42 : vector<24x256xf32>
    %44 = vector.extract_strided_slice %43 {offsets = [0, 0], sizes = [8, 256], strides = [1, 1]} : vector<24x256xf32> to vector<8x256xf32>
    %cst_18 = arith.constant 0.000000e+00 : f32
    %45 = vector.broadcast %cst_18 : f32 to vector<8x256xf32>
    %46 = arith.maximumf %44, %45 : vector<8x256xf32>
    %c0_19 = arith.constant 0 : index
    %c0_20 = arith.constant 0 : index
    %c0_21 = arith.constant 0 : index
    %47 = vector.load %arg11[%c0_19, %c0_20, %c0_21] : memref<1x40x256xf32, #tpu.memory_space<vmem>>, vector<1x8x256xf32>
    %48 = vector.shape_cast %47 : vector<1x8x256xf32> to vector<8x256xf32>
    %49 = vector.shape_cast %46 : vector<8x256xf32> to vector<1x8x256xf32>
    tpu.vector_store %arg11[%c0_19, %c0_20, %c0_21], %49 {strides = array<i32>} : memref<1x40x256xf32, #tpu.memory_space<vmem>>, vector<1x8x256xf32>,
    %50 = vector.extract_strided_slice %43 {offsets = [8, 0], sizes = [8, 256], strides = [1, 1]} : vector<24x256xf32> to vector<8x256xf32>
    %51 = vector.extract_strided_slice %43 {offsets = [16, 0], sizes = [8, 256], strides = [1, 1]} : vector<24x256xf32> to vector<8x256xf32>
    %cst_22 = arith.constant 0xFF800000 : f32
    %52 = vector.broadcast %cst_22 : f32 to vector<4x128xf32>
    %c0_23 = arith.constant 0 : index
    %c0_24 = arith.constant 0 : index
    %53 = vector.load %arg12[%c0_23, %c0_24] : memref<4x512xf32, #tpu.memory_space<vmem>>, vector<4x128xf32>
    tpu.vector_store %arg12[%c0_23, %c0_24], %52 {strides = array<i32>} : memref<4x512xf32, #tpu.memory_space<vmem>>, vector<4x128xf32>,
    %cst_25 = arith.constant 0xFF800000 : f32
    %54 = vector.broadcast %cst_25 : f32 to vector<4x128xf32>
    %c0_26 = arith.constant 0 : index
    %c384 = arith.constant 384 : index
    %55 = vector.load %arg12[%c0_26, %c384] : memref<4x512xf32, #tpu.memory_space<vmem>>, vector<4x128xf32>
    tpu.vector_store %arg12[%c0_26, %c384], %54 {strides = array<i32>} : memref<4x512xf32, #tpu.memory_space<vmem>>, vector<4x128xf32>,
    %c0_27 = arith.constant 0 : index
    %c128 = arith.constant 128 : index
    %56 = vector.load %arg12[%c0_27, %c128] : memref<4x512xf32, #tpu.memory_space<vmem>>, vector<4x256xf32>
    tpu.vector_store %arg12[%c0_27, %c128], %1 {strides = array<i32>} : memref<4x512xf32, #tpu.memory_space<vmem>>, vector<4x256xf32>,
    %c0_28 = arith.constant 0 : index
    %c111 = arith.constant 111 : index
    %57 = vector.load %arg12[%c0_28, %c111] : memref<4x512xf32, #tpu.memory_space<vmem>>, vector<4x256xf32>
    %cst_29 = arith.constant 0xFF800000 : f32
    %58 = vector.shape_cast %20 : vector<1x256xi1> to vector<1x256xi1>
    %59 = vector.broadcast %58 : vector<1x256xi1> to vector<4x256xi1>
    %60 = vector.broadcast %cst_29 : f32 to vector<4x256xf32>
    %61 = arith.select %59, %57, %60 : vector<4x256xi1>, vector<4x256xf32>
    %c0_30 = arith.constant 0 : index
    %c112 = arith.constant 112 : index
    %62 = vector.load %arg12[%c0_30, %c112] : memref<4x512xf32, #tpu.memory_space<vmem>>, vector<4x256xf32>
    %63 = arith.maximumf %61, %62 : vector<4x256xf32>
    %c0_31 = arith.constant 0 : index
    %c113 = arith.constant 113 : index
    %64 = vector.load %arg12[%c0_31, %c113] : memref<4x512xf32, #tpu.memory_space<vmem>>, vector<4x256xf32>
    %cst_32 = arith.constant 0xFF800000 : f32
    %65 = vector.shape_cast %29 : vector<1x256xi1> to vector<1x256xi1>
    %66 = vector.broadcast %65 : vector<1x256xi1> to vector<4x256xi1>
    %67 = vector.broadcast %cst_32 : f32 to vector<4x256xf32>
    %68 = arith.select %66, %64, %67 : vector<4x256xi1>, vector<4x256xf32>
    %69 = arith.maximumf %63, %68 : vector<4x256xf32>
    %c0_33 = arith.constant 0 : index
    %c127 = arith.constant 127 : index
    %70 = vector.load %arg12[%c0_33, %c127] : memref<4x512xf32, #tpu.memory_space<vmem>>, vector<4x256xf32>
    %cst_34 = arith.constant 0xFF800000 : f32
    %71 = vector.shape_cast %20 : vector<1x256xi1> to vector<1x256xi1>
    %72 = vector.broadcast %71 : vector<1x256xi1> to vector<4x256xi1>
    %73 = vector.broadcast %cst_34 : f32 to vector<4x256xf32>
    %74 = arith.select %72, %70, %73 : vector<4x256xi1>, vector<4x256xf32>
    %75 = arith.maximumf %69, %74 : vector<4x256xf32>
    %c0_35 = arith.constant 0 : index
    %c128_36 = arith.constant 128 : index
    %76 = vector.load %arg12[%c0_35, %c128_36] : memref<4x512xf32, #tpu.memory_space<vmem>>, vector<4x256xf32>
    %77 = arith.maximumf %75, %76 : vector<4x256xf32>
    %c0_37 = arith.constant 0 : index
    %c129 = arith.constant 129 : index
    %78 = vector.load %arg12[%c0_37, %c129] : memref<4x512xf32, #tpu.memory_space<vmem>>, vector<4x256xf32>
    %cst_38 = arith.constant 0xFF800000 : f32
    %79 = vector.shape_cast %29 : vector<1x256xi1> to vector<1x256xi1>
    %80 = vector.broadcast %79 : vector<1x256xi1> to vector<4x256xi1>
    %81 = vector.broadcast %cst_38 : f32 to vector<4x256xf32>
    %82 = arith.select %80, %78, %81 : vector<4x256xi1>, vector<4x256xf32>
    %83 = arith.maximumf %77, %82 : vector<4x256xf32>
    %c0_39 = arith.constant 0 : index
    %c143 = arith.constant 143 : index
    %84 = vector.load %arg12[%c0_39, %c143] : memref<4x512xf32, #tpu.memory_space<vmem>>, vector<4x256xf32>
    %cst_40 = arith.constant 0xFF800000 : f32
    %85 = vector.shape_cast %20 : vector<1x256xi1> to vector<1x256xi1>
    %86 = vector.broadcast %85 : vector<1x256xi1> to vector<4x256xi1>
    %87 = vector.broadcast %cst_40 : f32 to vector<4x256xf32>
    %88 = arith.select %86, %84, %87 : vector<4x256xi1>, vector<4x256xf32>
    %89 = arith.maximumf %83, %88 : vector<4x256xf32>
    %c0_41 = arith.constant 0 : index
    %c144 = arith.constant 144 : index
    %90 = vector.load %arg12[%c0_41, %c144] : memref<4x512xf32, #tpu.memory_space<vmem>>, vector<4x256xf32>
    %91 = arith.maximumf %89, %90 : vector<4x256xf32>
    %c0_42 = arith.constant 0 : index
    %c145 = arith.constant 145 : index
    %92 = vector.load %arg12[%c0_42, %c145] : memref<4x512xf32, #tpu.memory_space<vmem>>, vector<4x256xf32>
    %cst_43 = arith.constant 0xFF800000 : f32
    %93 = vector.shape_cast %29 : vector<1x256xi1> to vector<1x256xi1>
    %94 = vector.broadcast %93 : vector<1x256xi1> to vector<4x256xi1>
    %95 = vector.broadcast %cst_43 : f32 to vector<4x256xf32>
    %96 = arith.select %94, %92, %95 : vector<4x256xi1>, vector<4x256xf32>
    %97 = arith.maximumf %91, %96 : vector<4x256xf32>
    %c0_44 = arith.constant 0 : index
    %c0_45 = arith.constant 0 : index
    %98 = vector.load %arg5[%c0_44, %c0_45] : memref<8x4xf32, #tpu.memory_space<vmem>>, vector<8x4xf32>
    %cst_46 = arith.constant dense<0.000000e+00> : vector<8x256xf32>
    %99 = tpu.matmul %98, %97, %cst_46 {dimension_numbers = #tpu.dot_dimension_numbers<[1], [0], [0], [1], [0, 0, 1, 1], [], []>} : vector<8x4xf32>, vector<4x256xf32>, vector<8x256xf32> -> vector<8x256xf32>
    %c0_47 = arith.constant 0 : index
    %c0_48 = arith.constant 0 : index
    %100 = vector.load %arg6[%c0_47, %c0_48] : memref<8x1xf32, #tpu.memory_space<vmem>>, vector<8x1xf32>
    %101 = vector.broadcast %100 : vector<8x1xf32> to vector<8x256xf32>
    %102 = arith.addf %99, %101 : vector<8x256xf32>
    %cst_49 = arith.constant 0.000000e+00 : f32
    %103 = vector.broadcast %cst_49 : f32 to vector<8x256xf32>
    %104 = arith.maximumf %102, %103 : vector<8x256xf32>
    %c0_50 = arith.constant 0 : index
    %c32 = arith.constant 32 : index
    %c0_51 = arith.constant 0 : index
    %105 = vector.load %arg11[%c0_50, %c32, %c0_51] : memref<1x40x256xf32, #tpu.memory_space<vmem>>, vector<1x8x256xf32>
    %106 = vector.shape_cast %105 : vector<1x8x256xf32> to vector<8x256xf32>
    %107 = vector.shape_cast %104 : vector<8x256xf32> to vector<1x8x256xf32>
    tpu.vector_store %arg11[%c0_50, %c32, %c0_51], %107 {strides = array<i32>} : memref<1x40x256xf32, #tpu.memory_space<vmem>>, vector<1x8x256xf32>,
    %cst_52 = arith.constant 0.000000e+00 : f32
    %108 = vector.broadcast %cst_52 : f32 to vector<8x128xf32>
    %c0_53 = arith.constant 0 : index
    %c0_54 = arith.constant 0 : index
    %109 = vector.load %arg13[%c0_53, %c0_54] : memref<8x512xf32, #tpu.memory_space<vmem>>, vector<8x128xf32>
    tpu.vector_store %arg13[%c0_53, %c0_54], %108 {strides = array<i32>} : memref<8x512xf32, #tpu.memory_space<vmem>>, vector<8x128xf32>,
    %c0_55 = arith.constant 0 : index
    %c384_56 = arith.constant 384 : index
    %110 = vector.load %arg13[%c0_55, %c384_56] : memref<8x512xf32, #tpu.memory_space<vmem>>, vector<8x128xf32>
    tpu.vector_store %arg13[%c0_55, %c384_56], %108 {strides = array<i32>} : memref<8x512xf32, #tpu.memory_space<vmem>>, vector<8x128xf32>,
    %c0_57 = arith.constant 0 : index
    %c128_58 = arith.constant 128 : index
    %111 = vector.load %arg13[%c0_57, %c128_58] : memref<8x512xf32, #tpu.memory_space<vmem>>, vector<8x256xf32>
    tpu.vector_store %arg13[%c0_57, %c128_58], %50 {strides = array<i32>} : memref<8x512xf32, #tpu.memory_space<vmem>>, vector<8x256xf32>,
    %c0_59 = arith.constant 0 : index
    %c111_60 = arith.constant 111 : index
    %112 = vector.load %arg13[%c0_59, %c111_60] : memref<8x512xf32, #tpu.memory_space<vmem>>, vector<8x256xf32>
    %cst_61 = arith.constant 0.000000e+00 : f32
    %113 = vector.shape_cast %20 : vector<1x256xi1> to vector<1x256xi1>
    %114 = vector.broadcast %113 : vector<1x256xi1> to vector<8x256xi1>
    %115 = vector.broadcast %cst_61 : f32 to vector<8x256xf32>
    %116 = arith.select %114, %112, %115 : vector<8x256xi1>, vector<8x256xf32>
    %c0_62 = arith.constant 0 : index
    %c0_63 = arith.constant 0 : index
    %117 = vector.load %arg15[%c0_62, %c0_63] : memref<72x256xf32, #tpu.memory_space<vmem>>, vector<8x256xf32>
    tpu.vector_store %arg15[%c0_62, %c0_63], %116 {strides = array<i32>} : memref<72x256xf32, #tpu.memory_space<vmem>>, vector<8x256xf32>,
    %c0_64 = arith.constant 0 : index
    %c112_65 = arith.constant 112 : index
    %118 = vector.load %arg13[%c0_64, %c112_65] : memref<8x512xf32, #tpu.memory_space<vmem>>, vector<8x256xf32>
    %c8 = arith.constant 8 : index
    %c0_66 = arith.constant 0 : index
    %119 = vector.load %arg15[%c8, %c0_66] : memref<72x256xf32, #tpu.memory_space<vmem>>, vector<8x256xf32>
    tpu.vector_store %arg15[%c8, %c0_66], %118 {strides = array<i32>} : memref<72x256xf32, #tpu.memory_space<vmem>>, vector<8x256xf32>,
    %c0_67 = arith.constant 0 : index
    %c113_68 = arith.constant 113 : index
    %120 = vector.load %arg13[%c0_67, %c113_68] : memref<8x512xf32, #tpu.memory_space<vmem>>, vector<8x256xf32>
    %cst_69 = arith.constant 0.000000e+00 : f32
    %121 = vector.shape_cast %29 : vector<1x256xi1> to vector<1x256xi1>
    %122 = vector.broadcast %121 : vector<1x256xi1> to vector<8x256xi1>
    %123 = vector.broadcast %cst_69 : f32 to vector<8x256xf32>
    %124 = arith.select %122, %120, %123 : vector<8x256xi1>, vector<8x256xf32>
    %c16 = arith.constant 16 : index
    %c0_70 = arith.constant 0 : index
    %125 = vector.load %arg15[%c16, %c0_70] : memref<72x256xf32, #tpu.memory_space<vmem>>, vector<8x256xf32>
    tpu.vector_store %arg15[%c16, %c0_70], %124 {strides = array<i32>} : memref<72x256xf32, #tpu.memory_space<vmem>>, vector<8x256xf32>,
    %c0_71 = arith.constant 0 : index
    %c127_72 = arith.constant 127 : index
    %126 = vector.load %arg13[%c0_71, %c127_72] : memref<8x512xf32, #tpu.memory_space<vmem>>, vector<8x256xf32>
    %cst_73 = arith.constant 0.000000e+00 : f32
    %127 = vector.shape_cast %20 : vector<1x256xi1> to vector<1x256xi1>
    %128 = vector.broadcast %127 : vector<1x256xi1> to vector<8x256xi1>
    %129 = vector.broadcast %cst_73 : f32 to vector<8x256xf32>
    %130 = arith.select %128, %126, %129 : vector<8x256xi1>, vector<8x256xf32>
    %c24 = arith.constant 24 : index
    %c0_74 = arith.constant 0 : index
    %131 = vector.load %arg15[%c24, %c0_74] : memref<72x256xf32, #tpu.memory_space<vmem>>, vector<8x256xf32>
    tpu.vector_store %arg15[%c24, %c0_74], %130 {strides = array<i32>} : memref<72x256xf32, #tpu.memory_space<vmem>>, vector<8x256xf32>,
    %c0_75 = arith.constant 0 : index
    %c128_76 = arith.constant 128 : index
    %132 = vector.load %arg13[%c0_75, %c128_76] : memref<8x512xf32, #tpu.memory_space<vmem>>, vector<8x256xf32>
    %c32_77 = arith.constant 32 : index
    %c0_78 = arith.constant 0 : index
    %133 = vector.load %arg15[%c32_77, %c0_78] : memref<72x256xf32, #tpu.memory_space<vmem>>, vector<8x256xf32>
    tpu.vector_store %arg15[%c32_77, %c0_78], %132 {strides = array<i32>} : memref<72x256xf32, #tpu.memory_space<vmem>>, vector<8x256xf32>,
    %c0_79 = arith.constant 0 : index
    %c129_80 = arith.constant 129 : index
    %134 = vector.load %arg13[%c0_79, %c129_80] : memref<8x512xf32, #tpu.memory_space<vmem>>, vector<8x256xf32>
    %cst_81 = arith.constant 0.000000e+00 : f32
    %135 = vector.shape_cast %29 : vector<1x256xi1> to vector<1x256xi1>
    %136 = vector.broadcast %135 : vector<1x256xi1> to vector<8x256xi1>
    %137 = vector.broadcast %cst_81 : f32 to vector<8x256xf32>
    %138 = arith.select %136, %134, %137 : vector<8x256xi1>, vector<8x256xf32>
    %c40 = arith.constant 40 : index
    %c0_82 = arith.constant 0 : index
    %139 = vector.load %arg15[%c40, %c0_82] : memref<72x256xf32, #tpu.memory_space<vmem>>, vector<8x256xf32>
    tpu.vector_store %arg15[%c40, %c0_82], %138 {strides = array<i32>} : memref<72x256xf32, #tpu.memory_space<vmem>>, vector<8x256xf32>,
    %c0_83 = arith.constant 0 : index
    %c143_84 = arith.constant 143 : index
    %140 = vector.load %arg13[%c0_83, %c143_84] : memref<8x512xf32, #tpu.memory_space<vmem>>, vector<8x256xf32>
    %cst_85 = arith.constant 0.000000e+00 : f32
    %141 = vector.shape_cast %20 : vector<1x256xi1> to vector<1x256xi1>
    %142 = vector.broadcast %141 : vector<1x256xi1> to vector<8x256xi1>
    %143 = vector.broadcast %cst_85 : f32 to vector<8x256xf32>
    %144 = arith.select %142, %140, %143 : vector<8x256xi1>, vector<8x256xf32>
    %c48 = arith.constant 48 : index
    %c0_86 = arith.constant 0 : index
    %145 = vector.load %arg15[%c48, %c0_86] : memref<72x256xf32, #tpu.memory_space<vmem>>, vector<8x256xf32>
    tpu.vector_store %arg15[%c48, %c0_86], %144 {strides = array<i32>} : memref<72x256xf32, #tpu.memory_space<vmem>>, vector<8x256xf32>,
    %c0_87 = arith.constant 0 : index
    %c144_88 = arith.constant 144 : index
    %146 = vector.load %arg13[%c0_87, %c144_88] : memref<8x512xf32, #tpu.memory_space<vmem>>, vector<8x256xf32>
    %c56 = arith.constant 56 : index
    %c0_89 = arith.constant 0 : index
    %147 = vector.load %arg15[%c56, %c0_89] : memref<72x256xf32, #tpu.memory_space<vmem>>, vector<8x256xf32>
    tpu.vector_store %arg15[%c56, %c0_89], %146 {strides = array<i32>} : memref<72x256xf32, #tpu.memory_space<vmem>>, vector<8x256xf32>,
    %c0_90 = arith.constant 0 : index
    %c145_91 = arith.constant 145 : index
    %148 = vector.load %arg13[%c0_90, %c145_91] : memref<8x512xf32, #tpu.memory_space<vmem>>, vector<8x256xf32>
    %cst_92 = arith.constant 0.000000e+00 : f32
    %149 = vector.shape_cast %29 : vector<1x256xi1> to vector<1x256xi1>
    %150 = vector.broadcast %149 : vector<1x256xi1> to vector<8x256xi1>
    %151 = vector.broadcast %cst_92 : f32 to vector<8x256xf32>
    %152 = arith.select %150, %148, %151 : vector<8x256xi1>, vector<8x256xf32>
    %c64 = arith.constant 64 : index
    %c0_93 = arith.constant 0 : index
    %153 = vector.load %arg15[%c64, %c0_93] : memref<72x256xf32, #tpu.memory_space<vmem>>, vector<8x256xf32>
    tpu.vector_store %arg15[%c64, %c0_93], %152 {strides = array<i32>} : memref<72x256xf32, #tpu.memory_space<vmem>>, vector<8x256xf32>,
    %c0_94 = arith.constant 0 : index
    %c0_95 = arith.constant 0 : index
    %154 = vector.load %arg7[%c0_94, %c0_95] : memref<16x72xf32, #tpu.memory_space<vmem>>, vector<16x72xf32>
    %c0_96 = arith.constant 0 : index
    %c0_97 = arith.constant 0 : index
    %155 = vector.load %arg15[%c0_96, %c0_97] : memref<72x256xf32, #tpu.memory_space<vmem>>, vector<72x256xf32>
    %cst_98 = arith.constant dense<0.000000e+00> : vector<16x256xf32>
    %156 = tpu.matmul %154, %155, %cst_98 {dimension_numbers = #tpu.dot_dimension_numbers<[1], [0], [0], [1], [0, 0, 1, 1], [], []>} : vector<16x72xf32>, vector<72x256xf32>, vector<16x256xf32> -> vector<16x256xf32>
    %c0_99 = arith.constant 0 : index
    %c0_100 = arith.constant 0 : index
    %157 = vector.load %arg8[%c0_99, %c0_100] : memref<16x1xf32, #tpu.memory_space<vmem>>, vector<16x1xf32>
    %158 = vector.broadcast %157 : vector<16x1xf32> to vector<16x256xf32>
    %159 = arith.addf %156, %158 : vector<16x256xf32>
    %cst_101 = arith.constant 0.000000e+00 : f32
    %160 = vector.broadcast %cst_101 : f32 to vector<16x256xf32>
    %161 = arith.maximumf %159, %160 : vector<16x256xf32>
    %c0_102 = arith.constant 0 : index
    %c8_103 = arith.constant 8 : index
    %c0_104 = arith.constant 0 : index
    %162 = vector.load %arg11[%c0_102, %c8_103, %c0_104] : memref<1x40x256xf32, #tpu.memory_space<vmem>>, vector<1x16x256xf32>
    %163 = vector.shape_cast %162 : vector<1x16x256xf32> to vector<16x256xf32>
    %164 = vector.shape_cast %161 : vector<16x256xf32> to vector<1x16x256xf32>
    tpu.vector_store %arg11[%c0_102, %c8_103, %c0_104], %164 {strides = array<i32>} : memref<1x40x256xf32, #tpu.memory_space<vmem>>, vector<1x16x256xf32>,
    %cst_105 = arith.constant 0.000000e+00 : f32
    %165 = vector.broadcast %cst_105 : f32 to vector<8x128xf32>
    %c0_106 = arith.constant 0 : index
    %c0_107 = arith.constant 0 : index
    %166 = vector.load %arg14[%c0_106, %c0_107] : memref<8x512xf32, #tpu.memory_space<vmem>>, vector<8x128xf32>
    tpu.vector_store %arg14[%c0_106, %c0_107], %165 {strides = array<i32>} : memref<8x512xf32, #tpu.memory_space<vmem>>, vector<8x128xf32>,
    %c0_108 = arith.constant 0 : index
    %c384_109 = arith.constant 384 : index
    %167 = vector.load %arg14[%c0_108, %c384_109] : memref<8x512xf32, #tpu.memory_space<vmem>>, vector<8x128xf32>
    tpu.vector_store %arg14[%c0_108, %c384_109], %165 {strides = array<i32>} : memref<8x512xf32, #tpu.memory_space<vmem>>, vector<8x128xf32>,
    %c0_110 = arith.constant 0 : index
    %c128_111 = arith.constant 128 : index
    %168 = vector.load %arg14[%c0_110, %c128_111] : memref<8x512xf32, #tpu.memory_space<vmem>>, vector<8x256xf32>
    tpu.vector_store %arg14[%c0_110, %c128_111], %51 {strides = array<i32>} : memref<8x512xf32, #tpu.memory_space<vmem>>, vector<8x256xf32>,
    %c0_112 = arith.constant 0 : index
    %c94 = arith.constant 94 : index
    %169 = vector.load %arg14[%c0_112, %c94] : memref<8x512xf32, #tpu.memory_space<vmem>>, vector<8x256xf32>
    %cst_113 = arith.constant 0.000000e+00 : f32
    %170 = vector.shape_cast %11 : vector<1x256xi1> to vector<1x256xi1>
    %171 = vector.broadcast %170 : vector<1x256xi1> to vector<8x256xi1>
    %172 = vector.broadcast %cst_113 : f32 to vector<8x256xf32>
    %173 = arith.select %171, %169, %172 : vector<8x256xi1>, vector<8x256xf32>
    %c0_114 = arith.constant 0 : index
    %c0_115 = arith.constant 0 : index
    %174 = vector.load %arg16[%c0_114, %c0_115] : memref<200x256xf32, #tpu.memory_space<vmem>>, vector<8x256xf32>
    tpu.vector_store %arg16[%c0_114, %c0_115], %173 {strides = array<i32>} : memref<200x256xf32, #tpu.memory_space<vmem>>, vector<8x256xf32>,
    %c0_116 = arith.constant 0 : index
    %c95 = arith.constant 95 : index
    %175 = vector.load %arg14[%c0_116, %c95] : memref<8x512xf32, #tpu.memory_space<vmem>>, vector<8x256xf32>
    %cst_117 = arith.constant 0.000000e+00 : f32
    %176 = vector.shape_cast %20 : vector<1x256xi1> to vector<1x256xi1>
    %177 = vector.broadcast %176 : vector<1x256xi1> to vector<8x256xi1>
    %178 = vector.broadcast %cst_117 : f32 to vector<8x256xf32>
    %179 = arith.select %177, %175, %178 : vector<8x256xi1>, vector<8x256xf32>
    %c8_118 = arith.constant 8 : index
    %c0_119 = arith.constant 0 : index
    %180 = vector.load %arg16[%c8_118, %c0_119] : memref<200x256xf32, #tpu.memory_space<vmem>>, vector<8x256xf32>
    tpu.vector_store %arg16[%c8_118, %c0_119], %179 {strides = array<i32>} : memref<200x256xf32, #tpu.memory_space<vmem>>, vector<8x256xf32>,
    %c0_120 = arith.constant 0 : index
    %c96 = arith.constant 96 : index
    %181 = vector.load %arg14[%c0_120, %c96] : memref<8x512xf32, #tpu.memory_space<vmem>>, vector<8x256xf32>
    %c16_121 = arith.constant 16 : index
    %c0_122 = arith.constant 0 : index
    %182 = vector.load %arg16[%c16_121, %c0_122] : memref<200x256xf32, #tpu.memory_space<vmem>>, vector<8x256xf32>
    tpu.vector_store %arg16[%c16_121, %c0_122], %181 {strides = array<i32>} : memref<200x256xf32, #tpu.memory_space<vmem>>, vector<8x256xf32>,
    %c0_123 = arith.constant 0 : index
    %c97 = arith.constant 97 : index
    %183 = vector.load %arg14[%c0_123, %c97] : memref<8x512xf32, #tpu.memory_space<vmem>>, vector<8x256xf32>
    %cst_124 = arith.constant 0.000000e+00 : f32
    %184 = vector.shape_cast %29 : vector<1x256xi1> to vector<1x256xi1>
    %185 = vector.broadcast %184 : vector<1x256xi1> to vector<8x256xi1>
    %186 = vector.broadcast %cst_124 : f32 to vector<8x256xf32>
    %187 = arith.select %185, %183, %186 : vector<8x256xi1>, vector<8x256xf32>
    %c24_125 = arith.constant 24 : index
    %c0_126 = arith.constant 0 : index
    %188 = vector.load %arg16[%c24_125, %c0_126] : memref<200x256xf32, #tpu.memory_space<vmem>>, vector<8x256xf32>
    tpu.vector_store %arg16[%c24_125, %c0_126], %187 {strides = array<i32>} : memref<200x256xf32, #tpu.memory_space<vmem>>, vector<8x256xf32>,
    %c0_127 = arith.constant 0 : index
    %c98 = arith.constant 98 : index
    %189 = vector.load %arg14[%c0_127, %c98] : memref<8x512xf32, #tpu.memory_space<vmem>>, vector<8x256xf32>
    %cst_128 = arith.constant 0.000000e+00 : f32
    %190 = vector.shape_cast %38 : vector<1x256xi1> to vector<1x256xi1>
    %191 = vector.broadcast %190 : vector<1x256xi1> to vector<8x256xi1>
    %192 = vector.broadcast %cst_128 : f32 to vector<8x256xf32>
    %193 = arith.select %191, %189, %192 : vector<8x256xi1>, vector<8x256xf32>
    %c32_129 = arith.constant 32 : index
    %c0_130 = arith.constant 0 : index
    %194 = vector.load %arg16[%c32_129, %c0_130] : memref<200x256xf32, #tpu.memory_space<vmem>>, vector<8x256xf32>
    tpu.vector_store %arg16[%c32_129, %c0_130], %193 {strides = array<i32>} : memref<200x256xf32, #tpu.memory_space<vmem>>, vector<8x256xf32>,
    %c0_131 = arith.constant 0 : index
    %c110 = arith.constant 110 : index
    %195 = vector.load %arg14[%c0_131, %c110] : memref<8x512xf32, #tpu.memory_space<vmem>>, vector<8x256xf32>
    %cst_132 = arith.constant 0.000000e+00 : f32
    %196 = vector.shape_cast %11 : vector<1x256xi1> to vector<1x256xi1>
    %197 = vector.broadcast %196 : vector<1x256xi1> to vector<8x256xi1>
    %198 = vector.broadcast %cst_132 : f32 to vector<8x256xf32>
    %199 = arith.select %197, %195, %198 : vector<8x256xi1>, vector<8x256xf32>
    %c40_133 = arith.constant 40 : index
    %c0_134 = arith.constant 0 : index
    %200 = vector.load %arg16[%c40_133, %c0_134] : memref<200x256xf32, #tpu.memory_space<vmem>>, vector<8x256xf32>
    tpu.vector_store %arg16[%c40_133, %c0_134], %199 {strides = array<i32>} : memref<200x256xf32, #tpu.memory_space<vmem>>, vector<8x256xf32>,
    %c0_135 = arith.constant 0 : index
    %c111_136 = arith.constant 111 : index
    %201 = vector.load %arg14[%c0_135, %c111_136] : memref<8x512xf32, #tpu.memory_space<vmem>>, vector<8x256xf32>
    %cst_137 = arith.constant 0.000000e+00 : f32
    %202 = vector.shape_cast %20 : vector<1x256xi1> to vector<1x256xi1>
    %203 = vector.broadcast %202 : vector<1x256xi1> to vector<8x256xi1>
    %204 = vector.broadcast %cst_137 : f32 to vector<8x256xf32>
    %205 = arith.select %203, %201, %204 : vector<8x256xi1>, vector<8x256xf32>
    %c48_138 = arith.constant 48 : index
    %c0_139 = arith.constant 0 : index
    %206 = vector.load %arg16[%c48_138, %c0_139] : memref<200x256xf32, #tpu.memory_space<vmem>>, vector<8x256xf32>
    tpu.vector_store %arg16[%c48_138, %c0_139], %205 {strides = array<i32>} : memref<200x256xf32, #tpu.memory_space<vmem>>, vector<8x256xf32>,
    %c0_140 = arith.constant 0 : index
    %c112_141 = arith.constant 112 : index
    %207 = vector.load %arg14[%c0_140, %c112_141] : memref<8x512xf32, #tpu.memory_space<vmem>>, vector<8x256xf32>
    %c56_142 = arith.constant 56 : index
    %c0_143 = arith.constant 0 : index
    %208 = vector.load %arg16[%c56_142, %c0_143] : memref<200x256xf32, #tpu.memory_space<vmem>>, vector<8x256xf32>
    tpu.vector_store %arg16[%c56_142, %c0_143], %207 {strides = array<i32>} : memref<200x256xf32, #tpu.memory_space<vmem>>, vector<8x256xf32>,
    %c0_144 = arith.constant 0 : index
    %c113_145 = arith.constant 113 : index
    %209 = vector.load %arg14[%c0_144, %c113_145] : memref<8x512xf32, #tpu.memory_space<vmem>>, vector<8x256xf32>
    %cst_146 = arith.constant 0.000000e+00 : f32
    %210 = vector.shape_cast %29 : vector<1x256xi1> to vector<1x256xi1>
    %211 = vector.broadcast %210 : vector<1x256xi1> to vector<8x256xi1>
    %212 = vector.broadcast %cst_146 : f32 to vector<8x256xf32>
    %213 = arith.select %211, %209, %212 : vector<8x256xi1>, vector<8x256xf32>
    %c64_147 = arith.constant 64 : index
    %c0_148 = arith.constant 0 : index
    %214 = vector.load %arg16[%c64_147, %c0_148] : memref<200x256xf32, #tpu.memory_space<vmem>>, vector<8x256xf32>
    tpu.vector_store %arg16[%c64_147, %c0_148], %213 {strides = array<i32>} : memref<200x256xf32, #tpu.memory_space<vmem>>, vector<8x256xf32>,
    %c0_149 = arith.constant 0 : index
    %c114 = arith.constant 114 : index
    %215 = vector.load %arg14[%c0_149, %c114] : memref<8x512xf32, #tpu.memory_space<vmem>>, vector<8x256xf32>
    %cst_150 = arith.constant 0.000000e+00 : f32
    %216 = vector.shape_cast %38 : vector<1x256xi1> to vector<1x256xi1>
    %217 = vector.broadcast %216 : vector<1x256xi1> to vector<8x256xi1>
    %218 = vector.broadcast %cst_150 : f32 to vector<8x256xf32>
    %219 = arith.select %217, %215, %218 : vector<8x256xi1>, vector<8x256xf32>
    %c72 = arith.constant 72 : index
    %c0_151 = arith.constant 0 : index
    %220 = vector.load %arg16[%c72, %c0_151] : memref<200x256xf32, #tpu.memory_space<vmem>>, vector<8x256xf32>
    tpu.vector_store %arg16[%c72, %c0_151], %219 {strides = array<i32>} : memref<200x256xf32, #tpu.memory_space<vmem>>, vector<8x256xf32>,
    %c0_152 = arith.constant 0 : index
    %c126 = arith.constant 126 : index
    %221 = vector.load %arg14[%c0_152, %c126] : memref<8x512xf32, #tpu.memory_space<vmem>>, vector<8x256xf32>
    %cst_153 = arith.constant 0.000000e+00 : f32
    %222 = vector.shape_cast %11 : vector<1x256xi1> to vector<1x256xi1>
    %223 = vector.broadcast %222 : vector<1x256xi1> to vector<8x256xi1>
    %224 = vector.broadcast %cst_153 : f32 to vector<8x256xf32>
    %225 = arith.select %223, %221, %224 : vector<8x256xi1>, vector<8x256xf32>
    %c80 = arith.constant 80 : index
    %c0_154 = arith.constant 0 : index
    %226 = vector.load %arg16[%c80, %c0_154] : memref<200x256xf32, #tpu.memory_space<vmem>>, vector<8x256xf32>
    tpu.vector_store %arg16[%c80, %c0_154], %225 {strides = array<i32>} : memref<200x256xf32, #tpu.memory_space<vmem>>, vector<8x256xf32>,
    %c0_155 = arith.constant 0 : index
    %c127_156 = arith.constant 127 : index
    %227 = vector.load %arg14[%c0_155, %c127_156] : memref<8x512xf32, #tpu.memory_space<vmem>>, vector<8x256xf32>
    %cst_157 = arith.constant 0.000000e+00 : f32
    %228 = vector.shape_cast %20 : vector<1x256xi1> to vector<1x256xi1>
    %229 = vector.broadcast %228 : vector<1x256xi1> to vector<8x256xi1>
    %230 = vector.broadcast %cst_157 : f32 to vector<8x256xf32>
    %231 = arith.select %229, %227, %230 : vector<8x256xi1>, vector<8x256xf32>
    %c88 = arith.constant 88 : index
    %c0_158 = arith.constant 0 : index
    %232 = vector.load %arg16[%c88, %c0_158] : memref<200x256xf32, #tpu.memory_space<vmem>>, vector<8x256xf32>
    tpu.vector_store %arg16[%c88, %c0_158], %231 {strides = array<i32>} : memref<200x256xf32, #tpu.memory_space<vmem>>, vector<8x256xf32>,
    %c0_159 = arith.constant 0 : index
    %c128_160 = arith.constant 128 : index
    %233 = vector.load %arg14[%c0_159, %c128_160] : memref<8x512xf32, #tpu.memory_space<vmem>>, vector<8x256xf32>
    %c96_161 = arith.constant 96 : index
    %c0_162 = arith.constant 0 : index
    %234 = vector.load %arg16[%c96_161, %c0_162] : memref<200x256xf32, #tpu.memory_space<vmem>>, vector<8x256xf32>
    tpu.vector_store %arg16[%c96_161, %c0_162], %233 {strides = array<i32>} : memref<200x256xf32, #tpu.memory_space<vmem>>, vector<8x256xf32>,
    %c0_163 = arith.constant 0 : index
    %c129_164 = arith.constant 129 : index
    %235 = vector.load %arg14[%c0_163, %c129_164] : memref<8x512xf32, #tpu.memory_space<vmem>>, vector<8x256xf32>
    %cst_165 = arith.constant 0.000000e+00 : f32
    %236 = vector.shape_cast %29 : vector<1x256xi1> to vector<1x256xi1>
    %237 = vector.broadcast %236 : vector<1x256xi1> to vector<8x256xi1>
    %238 = vector.broadcast %cst_165 : f32 to vector<8x256xf32>
    %239 = arith.select %237, %235, %238 : vector<8x256xi1>, vector<8x256xf32>
    %c104 = arith.constant 104 : index
    %c0_166 = arith.constant 0 : index
    %240 = vector.load %arg16[%c104, %c0_166] : memref<200x256xf32, #tpu.memory_space<vmem>>, vector<8x256xf32>
    tpu.vector_store %arg16[%c104, %c0_166], %239 {strides = array<i32>} : memref<200x256xf32, #tpu.memory_space<vmem>>, vector<8x256xf32>,
    %c0_167 = arith.constant 0 : index
    %c130 = arith.constant 130 : index
    %241 = vector.load %arg14[%c0_167, %c130] : memref<8x512xf32, #tpu.memory_space<vmem>>, vector<8x256xf32>
    %cst_168 = arith.constant 0.000000e+00 : f32
    %242 = vector.shape_cast %38 : vector<1x256xi1> to vector<1x256xi1>
    %243 = vector.broadcast %242 : vector<1x256xi1> to vector<8x256xi1>
    %244 = vector.broadcast %cst_168 : f32 to vector<8x256xf32>
    %245 = arith.select %243, %241, %244 : vector<8x256xi1>, vector<8x256xf32>
    %c112_169 = arith.constant 112 : index
    %c0_170 = arith.constant 0 : index
    %246 = vector.load %arg16[%c112_169, %c0_170] : memref<200x256xf32, #tpu.memory_space<vmem>>, vector<8x256xf32>
    tpu.vector_store %arg16[%c112_169, %c0_170], %245 {strides = array<i32>} : memref<200x256xf32, #tpu.memory_space<vmem>>, vector<8x256xf32>,
    %c0_171 = arith.constant 0 : index
    %c142 = arith.constant 142 : index
    %247 = vector.load %arg14[%c0_171, %c142] : memref<8x512xf32, #tpu.memory_space<vmem>>, vector<8x256xf32>
    %cst_172 = arith.constant 0.000000e+00 : f32
    %248 = vector.shape_cast %11 : vector<1x256xi1> to vector<1x256xi1>
    %249 = vector.broadcast %248 : vector<1x256xi1> to vector<8x256xi1>
    %250 = vector.broadcast %cst_172 : f32 to vector<8x256xf32>
    %251 = arith.select %249, %247, %250 : vector<8x256xi1>, vector<8x256xf32>
    %c120 = arith.constant 120 : index
    %c0_173 = arith.constant 0 : index
    %252 = vector.load %arg16[%c120, %c0_173] : memref<200x256xf32, #tpu.memory_space<vmem>>, vector<8x256xf32>
    tpu.vector_store %arg16[%c120, %c0_173], %251 {strides = array<i32>} : memref<200x256xf32, #tpu.memory_space<vmem>>, vector<8x256xf32>,
    %c0_174 = arith.constant 0 : index
    %c143_175 = arith.constant 143 : index
    %253 = vector.load %arg14[%c0_174, %c143_175] : memref<8x512xf32, #tpu.memory_space<vmem>>, vector<8x256xf32>
    %cst_176 = arith.constant 0.000000e+00 : f32
    %254 = vector.shape_cast %20 : vector<1x256xi1> to vector<1x256xi1>
    %255 = vector.broadcast %254 : vector<1x256xi1> to vector<8x256xi1>
    %256 = vector.broadcast %cst_176 : f32 to vector<8x256xf32>
    %257 = arith.select %255, %253, %256 : vector<8x256xi1>, vector<8x256xf32>
    %c128_177 = arith.constant 128 : index
    %c0_178 = arith.constant 0 : index
    %258 = vector.load %arg16[%c128_177, %c0_178] : memref<200x256xf32, #tpu.memory_space<vmem>>, vector<8x256xf32>
    tpu.vector_store %arg16[%c128_177, %c0_178], %257 {strides = array<i32>} : memref<200x256xf32, #tpu.memory_space<vmem>>, vector<8x256xf32>,
    %c0_179 = arith.constant 0 : index
    %c144_180 = arith.constant 144 : index
    %259 = vector.load %arg14[%c0_179, %c144_180] : memref<8x512xf32, #tpu.memory_space<vmem>>, vector<8x256xf32>
    %c136 = arith.constant 136 : index
    %c0_181 = arith.constant 0 : index
    %260 = vector.load %arg16[%c136, %c0_181] : memref<200x256xf32, #tpu.memory_space<vmem>>, vector<8x256xf32>
    tpu.vector_store %arg16[%c136, %c0_181], %259 {strides = array<i32>} : memref<200x256xf32, #tpu.memory_space<vmem>>, vector<8x256xf32>,
    %c0_182 = arith.constant 0 : index
    %c145_183 = arith.constant 145 : index
    %261 = vector.load %arg14[%c0_182, %c145_183] : memref<8x512xf32, #tpu.memory_space<vmem>>, vector<8x256xf32>
    %cst_184 = arith.constant 0.000000e+00 : f32
    %262 = vector.shape_cast %29 : vector<1x256xi1> to vector<1x256xi1>
    %263 = vector.broadcast %262 : vector<1x256xi1> to vector<8x256xi1>
    %264 = vector.broadcast %cst_184 : f32 to vector<8x256xf32>
    %265 = arith.select %263, %261, %264 : vector<8x256xi1>, vector<8x256xf32>
    %c144_185 = arith.constant 144 : index
    %c0_186 = arith.constant 0 : index
    %266 = vector.load %arg16[%c144_185, %c0_186] : memref<200x256xf32, #tpu.memory_space<vmem>>, vector<8x256xf32>
    tpu.vector_store %arg16[%c144_185, %c0_186], %265 {strides = array<i32>} : memref<200x256xf32, #tpu.memory_space<vmem>>, vector<8x256xf32>,
    %c0_187 = arith.constant 0 : index
    %c146 = arith.constant 146 : index
    %267 = vector.load %arg14[%c0_187, %c146] : memref<8x512xf32, #tpu.memory_space<vmem>>, vector<8x256xf32>
    %cst_188 = arith.constant 0.000000e+00 : f32
    %268 = vector.shape_cast %38 : vector<1x256xi1> to vector<1x256xi1>
    %269 = vector.broadcast %268 : vector<1x256xi1> to vector<8x256xi1>
    %270 = vector.broadcast %cst_188 : f32 to vector<8x256xf32>
    %271 = arith.select %269, %267, %270 : vector<8x256xi1>, vector<8x256xf32>
    %c152 = arith.constant 152 : index
    %c0_189 = arith.constant 0 : index
    %272 = vector.load %arg16[%c152, %c0_189] : memref<200x256xf32, #tpu.memory_space<vmem>>, vector<8x256xf32>
    tpu.vector_store %arg16[%c152, %c0_189], %271 {strides = array<i32>} : memref<200x256xf32, #tpu.memory_space<vmem>>, vector<8x256xf32>,
    %c0_190 = arith.constant 0 : index
    %c158 = arith.constant 158 : index
    %273 = vector.load %arg14[%c0_190, %c158] : memref<8x512xf32, #tpu.memory_space<vmem>>, vector<8x256xf32>
    %cst_191 = arith.constant 0.000000e+00 : f32
    %274 = vector.shape_cast %11 : vector<1x256xi1> to vector<1x256xi1>
    %275 = vector.broadcast %274 : vector<1x256xi1> to vector<8x256xi1>
    %276 = vector.broadcast %cst_191 : f32 to vector<8x256xf32>
    %277 = arith.select %275, %273, %276 : vector<8x256xi1>, vector<8x256xf32>
    %c160 = arith.constant 160 : index
    %c0_192 = arith.constant 0 : index
    %278 = vector.load %arg16[%c160, %c0_192] : memref<200x256xf32, #tpu.memory_space<vmem>>, vector<8x256xf32>
    tpu.vector_store %arg16[%c160, %c0_192], %277 {strides = array<i32>} : memref<200x256xf32, #tpu.memory_space<vmem>>, vector<8x256xf32>,
    %c0_193 = arith.constant 0 : index
    %c159 = arith.constant 159 : index
    %279 = vector.load %arg14[%c0_193, %c159] : memref<8x512xf32, #tpu.memory_space<vmem>>, vector<8x256xf32>
    %cst_194 = arith.constant 0.000000e+00 : f32
    %280 = vector.shape_cast %20 : vector<1x256xi1> to vector<1x256xi1>
    %281 = vector.broadcast %280 : vector<1x256xi1> to vector<8x256xi1>
    %282 = vector.broadcast %cst_194 : f32 to vector<8x256xf32>
    %283 = arith.select %281, %279, %282 : vector<8x256xi1>, vector<8x256xf32>
    %c168 = arith.constant 168 : index
    %c0_195 = arith.constant 0 : index
    %284 = vector.load %arg16[%c168, %c0_195] : memref<200x256xf32, #tpu.memory_space<vmem>>, vector<8x256xf32>
    tpu.vector_store %arg16[%c168, %c0_195], %283 {strides = array<i32>} : memref<200x256xf32, #tpu.memory_space<vmem>>, vector<8x256xf32>,
    %c0_196 = arith.constant 0 : index
    %c160_197 = arith.constant 160 : index
    %285 = vector.load %arg14[%c0_196, %c160_197] : memref<8x512xf32, #tpu.memory_space<vmem>>, vector<8x256xf32>
    %c176 = arith.constant 176 : index
    %c0_198 = arith.constant 0 : index
    %286 = vector.load %arg16[%c176, %c0_198] : memref<200x256xf32, #tpu.memory_space<vmem>>, vector<8x256xf32>
    tpu.vector_store %arg16[%c176, %c0_198], %285 {strides = array<i32>} : memref<200x256xf32, #tpu.memory_space<vmem>>, vector<8x256xf32>,
    %c0_199 = arith.constant 0 : index
    %c161 = arith.constant 161 : index
    %287 = vector.load %arg14[%c0_199, %c161] : memref<8x512xf32, #tpu.memory_space<vmem>>, vector<8x256xf32>
    %cst_200 = arith.constant 0.000000e+00 : f32
    %288 = vector.shape_cast %29 : vector<1x256xi1> to vector<1x256xi1>
    %289 = vector.broadcast %288 : vector<1x256xi1> to vector<8x256xi1>
    %290 = vector.broadcast %cst_200 : f32 to vector<8x256xf32>
    %291 = arith.select %289, %287, %290 : vector<8x256xi1>, vector<8x256xf32>
    %c184 = arith.constant 184 : index
    %c0_201 = arith.constant 0 : index
    %292 = vector.load %arg16[%c184, %c0_201] : memref<200x256xf32, #tpu.memory_space<vmem>>, vector<8x256xf32>
    tpu.vector_store %arg16[%c184, %c0_201], %291 {strides = array<i32>} : memref<200x256xf32, #tpu.memory_space<vmem>>, vector<8x256xf32>,
    %c0_202 = arith.constant 0 : index
    %c162 = arith.constant 162 : index
    %293 = vector.load %arg14[%c0_202, %c162] : memref<8x512xf32, #tpu.memory_space<vmem>>, vector<8x256xf32>
    %cst_203 = arith.constant 0.000000e+00 : f32
    %294 = vector.shape_cast %38 : vector<1x256xi1> to vector<1x256xi1>
    %295 = vector.broadcast %294 : vector<1x256xi1> to vector<8x256xi1>
    %296 = vector.broadcast %cst_203 : f32 to vector<8x256xf32>
    %297 = arith.select %295, %293, %296 : vector<8x256xi1>, vector<8x256xf32>
    %c192 = arith.constant 192 : index
    %c0_204 = arith.constant 0 : index
    %298 = vector.load %arg16[%c192, %c0_204] : memref<200x256xf32, #tpu.memory_space<vmem>>, vector<8x256xf32>
    tpu.vector_store %arg16[%c192, %c0_204], %297 {strides = array<i32>} : memref<200x256xf32, #tpu.memory_space<vmem>>, vector<8x256xf32>,
    %c0_205 = arith.constant 0 : index
    %c0_206 = arith.constant 0 : index
    %299 = vector.load %arg9[%c0_205, %c0_206] : memref<8x200xf32, #tpu.memory_space<vmem>>, vector<8x200xf32>
    %c0_207 = arith.constant 0 : index
    %c0_208 = arith.constant 0 : index
    %300 = vector.load %arg16[%c0_207, %c0_208] : memref<200x256xf32, #tpu.memory_space<vmem>>, vector<200x256xf32>
    %cst_209 = arith.constant dense<0.000000e+00> : vector<8x256xf32>
    %301 = tpu.matmul %299, %300, %cst_209 {dimension_numbers = #tpu.dot_dimension_numbers<[1], [0], [0], [1], [0, 0, 1, 1], [], []>} : vector<8x200xf32>, vector<200x256xf32>, vector<8x256xf32> -> vector<8x256xf32>
    %c0_210 = arith.constant 0 : index
    %c0_211 = arith.constant 0 : index
    %302 = vector.load %arg10[%c0_210, %c0_211] : memref<8x1xf32, #tpu.memory_space<vmem>>, vector<8x1xf32>
    %303 = vector.broadcast %302 : vector<8x1xf32> to vector<8x256xf32>
    %304 = arith.addf %301, %303 : vector<8x256xf32>
    %cst_212 = arith.constant 0.000000e+00 : f32
    %305 = vector.broadcast %cst_212 : f32 to vector<8x256xf32>
    %306 = arith.maximumf %304, %305 : vector<8x256xf32>
    %c0_213 = arith.constant 0 : index
    %c24_214 = arith.constant 24 : index
    %c0_215 = arith.constant 0 : index
    %307 = vector.load %arg11[%c0_213, %c24_214, %c0_215] : memref<1x40x256xf32, #tpu.memory_space<vmem>>, vector<1x8x256xf32>
    %308 = vector.shape_cast %307 : vector<1x8x256xf32> to vector<8x256xf32>
    %309 = vector.shape_cast %306 : vector<8x256xf32> to vector<1x8x256xf32>
    tpu.vector_store %arg11[%c0_213, %c24_214, %c0_215], %309 {strides = array<i32>} : memref<1x40x256xf32, #tpu.memory_space<vmem>>, vector<1x8x256xf32>,
    return
  }
  func.func @transform_0(%arg0: i32) -> (i32, i32, i32) {
    %c0_i32 = arith.constant 0 : i32
    %c0_i32_0 = arith.constant 0 : i32
    %c0_i32_1 = arith.constant 0 : i32
    return %arg0, %c0_i32, %c0_i32_0 : i32, i32, i32
  }
  func.func @transform_1(%arg0: i32) -> (i32, i32) {
    %c0_i32 = arith.constant 0 : i32
    %c0_i32_0 = arith.constant 0 : i32
    %c0_i32_1 = arith.constant 0 : i32
    return %c0_i32, %c0_i32_0 : i32, i32
  }
  func.func @transform_2(%arg0: i32) -> (i32, i32) {
    %c0_i32 = arith.constant 0 : i32
    %c0_i32_0 = arith.constant 0 : i32
    %c0_i32_1 = arith.constant 0 : i32
    return %c0_i32, %c0_i32_0 : i32, i32
  }
  func.func @transform_3(%arg0: i32) -> (i32, i32) {
    %c0_i32 = arith.constant 0 : i32
    %c0_i32_0 = arith.constant 0 : i32
    %c0_i32_1 = arith.constant 0 : i32
    return %c0_i32, %c0_i32_0 : i32, i32
  }
  func.func @transform_4(%arg0: i32) -> (i32, i32) {
    %c0_i32 = arith.constant 0 : i32
    %c0_i32_0 = arith.constant 0 : i32
    %c0_i32_1 = arith.constant 0 : i32
    return %c0_i32, %c0_i32_0 : i32, i32
  }
  func.func @transform_5(%arg0: i32) -> (i32, i32) {
    %c0_i32 = arith.constant 0 : i32
    %c0_i32_0 = arith.constant 0 : i32
    %c0_i32_1 = arith.constant 0 : i32
    return %c0_i32, %c0_i32_0 : i32, i32
  }
  func.func @transform_6(%arg0: i32) -> (i32, i32) {
    %c0_i32 = arith.constant 0 : i32
    %c0_i32_0 = arith.constant 0 : i32
    %c0_i32_1 = arith.constant 0 : i32
    return %c0_i32, %c0_i32_0 : i32, i32
  }
  func.func @transform_7(%arg0: i32) -> (i32, i32) {
    %c0_i32 = arith.constant 0 : i32
    %c0_i32_0 = arith.constant 0 : i32
    %c0_i32_1 = arith.constant 0 : i32
    return %c0_i32, %c0_i32_0 : i32, i32
  }
  func.func @transform_8(%arg0: i32) -> (i32, i32) {
    %c0_i32 = arith.constant 0 : i32
    %c0_i32_0 = arith.constant 0 : i32
    %c0_i32_1 = arith.constant 0 : i32
    return %c0_i32, %c0_i32_0 : i32, i32
  }
  func.func @transform_9(%arg0: i32) -> (i32, i32) {
    %c0_i32 = arith.constant 0 : i32
    %c0_i32_0 = arith.constant 0 : i32
    %c0_i32_1 = arith.constant 0 : i32
    return %c0_i32, %c0_i32_0 : i32, i32
  }
  func.func @transform_10(%arg0: i32) -> (i32, i32, i32) {
    %c0_i32 = arith.constant 0 : i32
    %c0_i32_0 = arith.constant 0 : i32
    %c0_i32_1 = arith.constant 0 : i32
    return %arg0, %c0_i32, %c0_i32_0 : i32, i32, i32
  }
}

</mosaic_0001>

<llo_original>
// kernel: inception_block.1
$region0: #{inception_block.1}
  #allocation0 [shape = 'u32[]', space=smem, size = 0x4, offset = 0x4, fixed_abs, tag = 'smem constant byte address 0x4 - core index']
  #allocation1 [shape = 'u32[144,128]{1,0:T(1,128)}', space=vmem, size = 0x12000, scoped, tag = 'internal scratch']
  #allocation2 [shape = 'f32[4,512]{1,0:T(4,128)}', space=vmem, size = 0x2000, scoped, tag = 'scratch operand']
  #allocation3 [shape = 'f32[8,512]{1,0:T(8,128)}', space=vmem, size = 0x4000, scoped, tag = 'scratch operand']
  #allocation4 [shape = 'f32[8,512]{1,0:T(8,128)}', space=vmem, size = 0x4000, scoped, tag = 'scratch operand']
  #allocation5 [shape = 'f32[72,256]{1,0:T(8,128)}', space=vmem, size = 0x12000, scoped, tag = 'scratch operand']
  #allocation6 [shape = 'f32[200,256]{1,0:T(8,128)}', space=vmem, size = 0x32000, scoped, tag = 'scratch operand']
  %s0 = inlined_call_operand.vmem [shape: f32[2,4,256], index: 0, kind: input, shape index: {}]
  %s1 = inlined_call_operand.vmem [shape: s32[1,256], index: 1, kind: input, shape index: {}]
  %s2 = inlined_call_operand.vmem [shape: f32[24,4], index: 2, kind: input, shape index: {}]
  %s3 = inlined_call_operand.vmem [shape: f32[24,1], index: 3, kind: input, shape index: {}]
  %s4 = inlined_call_operand.vmem [shape: f32[8,4], index: 4, kind: input, shape index: {}]
  %s5 = inlined_call_operand.vmem [shape: f32[8,1], index: 5, kind: input, shape index: {}]
  %s6 = inlined_call_operand.vmem [shape: f32[16,72], index: 6, kind: input, shape index: {}]
  %s7 = inlined_call_operand.vmem [shape: f32[16,1], index: 7, kind: input, shape index: {}]
  %s8 = inlined_call_operand.vmem [shape: f32[8,200], index: 8, kind: input, shape index: {}]
  %s9 = inlined_call_operand.vmem [shape: f32[8,1], index: 9, kind: input, shape index: {}]
  %s10 = inlined_call_operand.vmem [shape: f32[2,40,256], index: 10, kind: output, shape index: {}]
  %s11 = sld [smem:[#allocation0]]
  $region73: #{inception_block.1} parent=0
    _
  %s13 = ssub.s32 1, %s11
  %s14 = scalar_select 0, %s13, %s11
  loop: start=0, step=1, limit=4
  $region2: #{inception_block.1} parent=0 // loop_pre_header
    _
  $region3: #{inception_block.1} parent=0 // loop_header
    %s16 = sphi 0, %s20
    %p17 = scmp.ge.s32.totalorder %s16, 4
    %s26 = sphi 0, %s28
    %s29 = sphi 0, %s26
    %s30 = sphi 0, %s29
    %s46 = sphi 0, %s30
    %s50 = sphi 0, %s50
    %s52 = sphi 0, %s50
    %s53 = sphi 0, %s52
    %s67 = sphi 0, %s53
    %s71 = sphi 0, %s71
    %s73 = sphi 0, %s71
    %s74 = sphi 0, %s73
    %s88 = sphi 0, %s74
    %s92 = sphi 0, %s92
    %s94 = sphi 0, %s92
    %s95 = sphi 0, %s94
    %s109 = sphi 0, %s95
    %s113 = sphi 0, %s113
    %s115 = sphi 0, %s113
    %s116 = sphi 0, %s115
    %s130 = sphi 0, %s116
    %s134 = sphi 0, %s134
    %s136 = sphi 0, %s134
    %s137 = sphi 0, %s136
    %s151 = sphi 0, %s137
    %s155 = sphi 0, %s155
    %s157 = sphi 0, %s155
    %s158 = sphi 0, %s157
    %s172 = sphi 0, %s158
    %s176 = sphi 0, %s176
    %s178 = sphi 0, %s176
    %s179 = sphi 0, %s178
    %s193 = sphi 0, %s179
    %s197 = sphi 0, %s197
    %s199 = sphi 0, %s197
    %s200 = sphi 0, %s199
    %s214 = sphi 0, %s200
    %s218 = sphi 0, %s218
    %s220 = sphi 0, %s218
    %s221 = sphi 0, %s220
    %s235 = sphi 0, %s221
    %s241 = sphi 0, %s243
    %s244 = sphi 0, %s241
    %s245 = sphi 0, %s244
    %s261 = sphi 0, %s245
  $region4: #{inception_block.1} parent=0 // loop_header_branch
    %19 = sbr.rel (%p17) target = $region8
  $region5: #{inception_block.1} parent=0 // loop_body
    %s21 = ssub.s32 %s16, 1
    %s22 = ssub.s32 %s16, 2
    %s23 = sadd.s32 %s16, 1
    %s24 = ssub.s32 %s16, %s23
    %p25 = scmp.eq.s32.totalorder %s24, 0
    %s27 = sadd.s32 %s26, 1
    %s28 = scalar_select %p25, %s26, %s27
    %p31 = pneg %p25
    %p32 = scmp.eq.s32.totalorder %s16, 1
    %p33 = por %p31, %p32
    %p34 = scmp.ne.s32.totalorder %s26, %s29
    %p35 = scmp.eq.s32.totalorder %s16, 0
    %p36 = por %p34, %p35
    %p37 = scmp.ne.s32.totalorder %s26, %s29
    %p38 = scmp.eq.s32.totalorder %s21, 1
    %p39 = por %p37, %p38
    %p40 = scmp.ne.s32.totalorder %s29, %s30
    %p41 = scmp.eq.s32.totalorder %s21, 0
    %p42 = por %p40, %p41
    %p43 = scmp.ne.s32.totalorder %s29, %s30
    %p44 = scmp.eq.s32.totalorder %s22, 1
    %p45 = por %p43, %p44
    %p47 = scmp.ne.s32.totalorder %s30, %s46
    %p48 = scmp.eq.s32.totalorder %s22, 0
    %p49 = por %p47, %p48
    %s51 = sadd.s32 %s50, 1
    %p54 = scmp.eq.s32.totalorder %s16, 1
    %p55 = scmp.ne.s32.totalorder %s50, %s52
    %p56 = scmp.eq.s32.totalorder %s16, 0
    %p57 = por %p55, %p56
    %p58 = scmp.ne.s32.totalorder %s50, %s52
    %p59 = scmp.eq.s32.totalorder %s21, 1
    %p60 = por %p58, %p59
    %p61 = scmp.ne.s32.totalorder %s52, %s53
    %p62 = scmp.eq.s32.totalorder %s21, 0
    %p63 = por %p61, %p62
    %p64 = scmp.ne.s32.totalorder %s52, %s53
    %p65 = scmp.eq.s32.totalorder %s22, 1
    %p66 = por %p64, %p65
    %p68 = scmp.ne.s32.totalorder %s53, %s67
    %p69 = scmp.eq.s32.totalorder %s22, 0
    %p70 = por %p68, %p69
    %s72 = sadd.s32 %s71, 1
    %p75 = scmp.eq.s32.totalorder %s16, 1
    %p76 = scmp.ne.s32.totalorder %s71, %s73
    %p77 = scmp.eq.s32.totalorder %s16, 0
    %p78 = por %p76, %p77
    %p79 = scmp.ne.s32.totalorder %s71, %s73
    %p80 = scmp.eq.s32.totalorder %s21, 1
    %p81 = por %p79, %p80
    %p82 = scmp.ne.s32.totalorder %s73, %s74
    %p83 = scmp.eq.s32.totalorder %s21, 0
    %p84 = por %p82, %p83
    %p85 = scmp.ne.s32.totalorder %s73, %s74
    %p86 = scmp.eq.s32.totalorder %s22, 1
    %p87 = por %p85, %p86
    %p89 = scmp.ne.s32.totalorder %s74, %s88
    %p90 = scmp.eq.s32.totalorder %s22, 0
    %p91 = por %p89, %p90
    %s93 = sadd.s32 %s92, 1
    %p96 = scmp.eq.s32.totalorder %s16, 1
    %p97 = scmp.ne.s32.totalorder %s92, %s94
    %p98 = scmp.eq.s32.totalorder %s16, 0
    %p99 = por %p97, %p98
    %p100 = scmp.ne.s32.totalorder %s92, %s94
    %p101 = scmp.eq.s32.totalorder %s21, 1
    %p102 = por %p100, %p101
    %p103 = scmp.ne.s32.totalorder %s94, %s95
    %p104 = scmp.eq.s32.totalorder %s21, 0
    %p105 = por %p103, %p104
    %p106 = scmp.ne.s32.totalorder %s94, %s95
    %p107 = scmp.eq.s32.totalorder %s22, 1
    %p108 = por %p106, %p107
    %p110 = scmp.ne.s32.totalorder %s95, %s109
    %p111 = scmp.eq.s32.totalorder %s22, 0
    %p112 = por %p110, %p111
    %s114 = sadd.s32 %s113, 1
    %p117 = scmp.eq.s32.totalorder %s16, 1
    %p118 = scmp.ne.s32.totalorder %s113, %s115
    %p119 = scmp.eq.s32.totalorder %s16, 0
    %p120 = por %p118, %p119
    %p121 = scmp.ne.s32.totalorder %s113, %s115
    %p122 = scmp.eq.s32.totalorder %s21, 1
    %p123 = por %p121, %p122
    %p124 = scmp.ne.s32.totalorder %s115, %s116
    %p125 = scmp.eq.s32.totalorder %s21, 0
    %p126 = por %p124, %p125
    %p127 = scmp.ne.s32.totalorder %s115, %s116
    %p128 = scmp.eq.s32.totalorder %s22, 1
    %p129 = por %p127, %p128
    %p131 = scmp.ne.s32.totalorder %s116, %s130
    %p132 = scmp.eq.s32.totalorder %s22, 0
    %p133 = por %p131, %p132
    %s135 = sadd.s32 %s134, 1
    %p138 = scmp.eq.s32.totalorder %s16, 1
    %p139 = scmp.ne.s32.totalorder %s134, %s136
    %p140 = scmp.eq.s32.totalorder %s16, 0
    %p141 = por %p139, %p140
    %p142 = scmp.ne.s32.totalorder %s134, %s136
    %p143 = scmp.eq.s32.totalorder %s21, 1
    %p144 = por %p142, %p143
    %p145 = scmp.ne.s32.totalorder %s136, %s137
    %p146 = scmp.eq.s32.totalorder %s21, 0
    %p147 = por %p145, %p146
    %p148 = scmp.ne.s32.totalorder %s136, %s137
    %p149 = scmp.eq.s32.totalorder %s22, 1
    %p150 = por %p148, %p149
    %p152 = scmp.ne.s32.totalorder %s137, %s151
    %p153 = scmp.eq.s32.totalorder %s22, 0
    %p154 = por %p152, %p153
    %s156 = sadd.s32 %s155, 1
    %p159 = scmp.eq.s32.totalorder %s16, 1
    %p160 = scmp.ne.s32.totalorder %s155, %s157
    %p161 = scmp.eq.s32.totalorder %s16, 0
    %p162 = por %p160, %p161
    %p163 = scmp.ne.s32.totalorder %s155, %s157
    %p164 = scmp.eq.s32.totalorder %s21, 1
    %p165 = por %p163, %p164
    %p166 = scmp.ne.s32.totalorder %s157, %s158
    %p167 = scmp.eq.s32.totalorder %s21, 0
    %p168 = por %p166, %p167
    %p169 = scmp.ne.s32.totalorder %s157, %s158
    %p170 = scmp.eq.s32.totalorder %s22, 1
    %p171 = por %p169, %p170
    %p173 = scmp.ne.s32.totalorder %s158, %s172
    %p174 = scmp.eq.s32.totalorder %s22, 0
    %p175 = por %p173, %p174
    %s177 = sadd.s32 %s176, 1
    %p180 = scmp.eq.s32.totalorder %s16, 1
    %p181 = scmp.ne.s32.totalorder %s176, %s178
    %p182 = scmp.eq.s32.totalorder %s16, 0
    %p183 = por %p181, %p182
    %p184 = scmp.ne.s32.totalorder %s176, %s178
    %p185 = scmp.eq.s32.totalorder %s21, 1
    %p186 = por %p184, %p185
    %p187 = scmp.ne.s32.totalorder %s178, %s179
    %p188 = scmp.eq.s32.totalorder %s21, 0
    %p189 = por %p187, %p188
    %p190 = scmp.ne.s32.totalorder %s178, %s179
    %p191 = scmp.eq.s32.totalorder %s22, 1
    %p192 = por %p190, %p191
    %p194 = scmp.ne.s32.totalorder %s179, %s193
    %p195 = scmp.eq.s32.totalorder %s22, 0
    %p196 = por %p194, %p195
    %s198 = sadd.s32 %s197, 1
    %p201 = scmp.eq.s32.totalorder %s16, 1
    %p202 = scmp.ne.s32.totalorder %s197, %s199
    %p203 = scmp.eq.s32.totalorder %s16, 0
    %p204 = por %p202, %p203
    %p205 = scmp.ne.s32.totalorder %s197, %s199
    %p206 = scmp.eq.s32.totalorder %s21, 1
    %p207 = por %p205, %p206
    %p208 = scmp.ne.s32.totalorder %s199, %s200
    %p209 = scmp.eq.s32.totalorder %s21, 0
    %p210 = por %p208, %p209
    %p211 = scmp.ne.s32.totalorder %s199, %s200
    %p212 = scmp.eq.s32.totalorder %s22, 1
    %p213 = por %p211, %p212
    %p215 = scmp.ne.s32.totalorder %s200, %s214
    %p216 = scmp.eq.s32.totalorder %s22, 0
    %p217 = por %p215, %p216
    %s219 = sadd.s32 %s218, 1
    %p222 = scmp.eq.s32.totalorder %s16, 1
    %p223 = scmp.ne.s32.totalorder %s218, %s220
    %p224 = scmp.eq.s32.totalorder %s16, 0
    %p225 = por %p223, %p224
    %p226 = scmp.ne.s32.totalorder %s218, %s220
    %p227 = scmp.eq.s32.totalorder %s21, 1
    %p228 = por %p226, %p227
    %p229 = scmp.ne.s32.totalorder %s220, %s221
    %p230 = scmp.eq.s32.totalorder %s21, 0
    %p231 = por %p229, %p230
    %p232 = scmp.ne.s32.totalorder %s220, %s221
    %p233 = scmp.eq.s32.totalorder %s22, 1
    %p234 = por %p232, %p233
    %p236 = scmp.ne.s32.totalorder %s221, %s235
    %p237 = scmp.eq.s32.totalorder %s22, 0
    %p238 = por %p236, %p237
    %s239 = ssub.s32 %s16, %s23
    %p240 = scmp.eq.s32.totalorder %s239, 0
    %s242 = sadd.s32 %s241, 1
    %s243 = scalar_select %p240, %s241, %s242
    %p246 = pneg %p240
    %p247 = scmp.eq.s32.totalorder %s16, 1
    %p248 = por %p246, %p247
    %p249 = scmp.ne.s32.totalorder %s241, %s244
    %p250 = scmp.eq.s32.totalorder %s16, 0
    %p251 = por %p249, %p250
    %p252 = scmp.ne.s32.totalorder %s241, %s244
    %p253 = scmp.eq.s32.totalorder %s21, 1
    %p254 = por %p252, %p253
    %p255 = scmp.ne.s32.totalorder %s244, %s245
    %p256 = scmp.eq.s32.totalorder %s21, 0
    %p257 = por %p255, %p256
    %p258 = scmp.ne.s32.totalorder %s244, %s245
    %p259 = scmp.eq.s32.totalorder %s22, 1
    %p260 = por %p258, %p259
    %p262 = scmp.ne.s32.totalorder %s245, %s261
    %p263 = scmp.eq.s32.totalorder %s22, 0
    %p264 = por %p262, %p263
    %p265 = scmp.le.s32.totalorder 1, %s16
    %p266 = scmp.lt.s32.totalorder %s16, 3
    %p267 = pnand %p265, %p266
    %p268 = pneg %p267
    // Predicated region
    $region9: #{inception_block.1} parent=5 // pred_check
      _
    $region10: #{inception_block.1} parent=5 // pred_check_branch
      %270 = sbr.rel (%p267) target = $region12
    $region11: #{inception_block.1} parent=5 // pred_region
      %s271 = ssub.s32 %s16, 1
      // Predicated region
      $region13: #{inception_block.1} parent=11 // pred_check
        %p272 = pneg %p63
      $region14: #{inception_block.1} parent=11 // pred_check_branch
        %274 = sbr.rel (%p272) target = $region16
      $region15: #{inception_block.1} parent=11 // pred_region
        _
      $region16: #{inception_block.1} parent=11 // pred_fallthru
        _
      // Predicated region
      $region17: #{inception_block.1} parent=11 // pred_check
        %p275 = pneg %p84
      $region18: #{inception_block.1} parent=11 // pred_check_branch
        %277 = sbr.rel (%p275) target = $region20
      $region19: #{inception_block.1} parent=11 // pred_region
        _
      $region20: #{inception_block.1} parent=11 // pred_fallthru
        _
      // Predicated region
      $region21: #{inception_block.1} parent=11 // pred_check
        %p278 = pneg %p105
      $region22: #{inception_block.1} parent=11 // pred_check_branch
        %280 = sbr.rel (%p278) target = $region24
      $region23: #{inception_block.1} parent=11 // pred_region
        _
      $region24: #{inception_block.1} parent=11 // pred_fallthru
        _
      // Predicated region
      $region25: #{inception_block.1} parent=11 // pred_check
        %p281 = pneg %p126
      $region26: #{inception_block.1} parent=11 // pred_check_branch
        %283 = sbr.rel (%p281) target = $region28
      $region27: #{inception_block.1} parent=11 // pred_region
        _
      $region28: #{inception_block.1} parent=11 // pred_fallthru
        _
      // Predicated region
      $region29: #{inception_block.1} parent=11 // pred_check
        %p284 = pneg %p147
      $region30: #{inception_block.1} parent=11 // pred_check_branch
        %286 = sbr.rel (%p284) target = $region32
      $region31: #{inception_block.1} parent=11 // pred_region
        _
      $region32: #{inception_block.1} parent=11 // pred_fallthru
        _
      // Predicated region
      $region33: #{inception_block.1} parent=11 // pred_check
        %p287 = pneg %p168
      $region34: #{inception_block.1} parent=11 // pred_check_branch
        %289 = sbr.rel (%p287) target = $region36
      $region35: #{inception_block.1} parent=11 // pred_region
        _
      $region36: #{inception_block.1} parent=11 // pred_fallthru
        _
      // Predicated region
      $region37: #{inception_block.1} parent=11 // pred_check
        %p290 = pneg %p189
      $region38: #{inception_block.1} parent=11 // pred_check_branch
        %292 = sbr.rel (%p290) target = $region40
      $region39: #{inception_block.1} parent=11 // pred_region
        _
      $region40: #{inception_block.1} parent=11 // pred_fallthru
        _
      // Predicated region
      $region41: #{inception_block.1} parent=11 // pred_check
        %p293 = pneg %p210
      $region42: #{inception_block.1} parent=11 // pred_check_branch
        %295 = sbr.rel (%p293) target = $region44
      $region43: #{inception_block.1} parent=11 // pred_region
        _
      $region44: #{inception_block.1} parent=11 // pred_fallthru
        _
      // Predicated region
      $region45: #{inception_block.1} parent=11 // pred_check
        %p296 = pneg %p231
      $region46: #{inception_block.1} parent=11 // pred_check_branch
        %298 = sbr.rel (%p296) target = $region48
      $region47: #{inception_block.1} parent=11 // pred_region
        _
      $region48: #{inception_block.1} parent=11 // pred_fallthru
        _
    $region12: #{inception_block.1} parent=5 // pred_fallthru
      _
    %p299 = scmp.lt.s32.totalorder %s16, 2
    // Predicated region
    $region49: #{inception_block.1} parent=5 // pred_check
      %p300 = pneg %p299
    $region50: #{inception_block.1} parent=5 // pred_check_branch
      %302 = sbr.rel (%p300) target = $region52
    $region51: #{inception_block.1} parent=5 // pred_region
      // Predicated region
      $region53: #{inception_block.1} parent=51 // pred_check
        %p303 = pneg %p36
      $region54: #{inception_block.1} parent=51 // pred_check_branch
        %305 = sbr.rel (%p303) target = $region56
      $region55: #{inception_block.1} parent=51 // pred_region
        %p306 = scmp.lt.s32.totalorder %s16, 1
        %s307 = scalar_select %p306, %s16, 1
        %s308 = smul.addr %s307, 2
        %s309 = smul.addr %s308, 4
        %s310 = scalar_lea.vmem %s0, %s309
      $region56: #{inception_block.1} parent=51 // pred_fallthru
        _
    $region52: #{inception_block.1} parent=5 // pred_fallthru
      _
    %p311 = scmp.le.s32.totalorder 1, %s16
    %p312 = scmp.lt.s32.totalorder %s16, 3
    %p313 = pnand %p311, %p312
    %p314 = pneg %p313
    // Predicated region
    $region57: #{inception_block.1} parent=5 // pred_check
      _
    $region58: #{inception_block.1} parent=5 // pred_check_branch
      %316 = sbr.rel (%p313) target = $region60
    $region59: #{inception_block.1} parent=5 // pred_region
      %s317 = ssub.s32 %s16, 1
      %p318 = scmp.lt.s32.totalorder %s21, 1
      %s319 = scalar_select %p318, %s21, 1
      %s320 = smul.addr %s319, 2
      %s321 = smul.addr %s320, 4
      %s322 = scalar_lea.vmem %s0, %s321
      %p323 = pneg %p42
      %p324 = pneg %p39
      %p325 = pneg %p63
      %p326 = pneg %p60
      %p327 = pneg %p84
      %p328 = pneg %p81
      %p329 = pneg %p105
      %p330 = pneg %p102
      %p331 = pneg %p126
      %p332 = pneg %p123
      %p333 = pneg %p147
      %p334 = pneg %p144
      %p335 = pneg %p168
      %p336 = pneg %p165
      %p337 = pneg %p189
      %p338 = pneg %p186
      %p339 = pneg %p210
      %p340 = pneg %p207
      %p341 = pneg %p231
      %p342 = pneg %p228
      %p343 = pneg %p257
      %p344 = pneg %p254
      %p345 = scmp.lt.s32.totalorder %s21, 1
      %s346 = scalar_select %p345, %s21, 1
      %s347 = smul.addr %s346, 10
      %s348 = smul.addr %s347, 8
      %s349 = scalar_lea.vmem %s10, %s348
      %p350 = scmp.lt.s32.totalorder %s21, 1
      %s351 = scalar_select %p350, %s21, 1
      %s352 = smul.addr %s351, 2
      %s353 = smul.addr %s352, 4
      %s354 = scalar_lea.vmem %s0, %s353
      %p355 = scmp.lt.s32.totalorder %s21, 1
      %s356 = scalar_select %p355, %s21, 1
      %s357 = smul.addr %s356, 10
      %s358 = smul.addr %s357, 8
      %s359 = scalar_lea.vmem %s10, %s358
      %v360 = vld [vmem:[%s354] sm:$0xff]
      %v361 = vld [vmem:[%s1] sm:$0x3]
      %v362 = vadd.s32 %v361, 4294967294
      %vm363 = vcmp.ge.s32.totalorder %v362, 0
      %vm364 = vcmp.lt.s32.totalorder %v362, 16
      %vm365 = vmand %vm363, %vm364
      %v366 = vadd.s32 %v361, 4294967295
      %vm367 = vcmp.ge.s32.totalorder %v366, 0
      %vm368 = vcmp.lt.s32.totalorder %v366, 16
      %vm369 = vmand %vm367, %vm368
      %v370 = vadd.s32 %v361, 1
      %vm371 = vcmp.ge.s32.totalorder %v370, 0
      %vm372 = vcmp.lt.s32.totalorder %v370, 16
      %vm373 = vmand %vm371, %vm372
      %v374 = vadd.s32 %v361, 2
      %vm375 = vcmp.ge.s32.totalorder %v374, 0
      %vm376 = vcmp.lt.s32.totalorder %v374, 16
      %vm377 = vmand %vm375, %vm376
      %v378 = vld [vmem:[%s2] sm:$0xff]
      %v379 = vld [vmem:[%s2 + $0x8] sm:$0xff]
      %v380 = vld [vmem:[%s2 + $0x10] sm:$0xff]
      %v381 = vld [vmem:[%s3] sm:$0xff]
      %v382 = vld [vmem:[%s3 + $0x8] sm:$0xff]
      %v383 = vld [vmem:[%s3 + $0x10] sm:$0xff]
      %385 = vset.pattern.permute.xlu0 0
      %386 = vperm.xlu0 %385, %v381
      %v387 = vpop.permute.xlu0 %386
      %390 = vset.pattern.permute.xlu0 0
      %391 = vperm.xlu0 %390, %v382
      %v392 = vpop.permute.xlu0 %391
      %395 = vset.pattern.permute.xlu0 0
      %396 = vperm.xlu0 %395, %v383
      %v397 = vpop.permute.xlu0 %396
      %v400 = vcombine.high %v360, %v360
      %vm401 = vcmask 31744
      %v403 = vsel %vm401, %v378, 0
      %v406 = vsel %vm401, %v379, 0
      %v409 = vsel %vm401, %v380, 0
      %vm411 = vcmask 1043456
      %v412 = vsel %vm411, %v360, 0
      %v414 = vsel %vm411, %v400, 0
      %416 = vmatprep.subr.mxu0 %v414
      %417 = vmatpush1.msra.mxu0 %v412
      %418 = vmatprep.subr.mxu0 0.0
      %419 = vmatpush1.msra.mxu0 0.0
      %420 = vmatprep.subr.mxu0 0.0
      %421 = vmatpush1.msra.mxu0 0.0
      %422 = vmatprep.subr.mxu0 0.0
      %423 = vmatpush1.msra.mxu0 0.0
      %424 = vmatprep.subr.mxu0 0.0
      %425 = vmatpush1.msra.mxu0 0.0
      %426 = vmatprep.subr.mxu0 0.0
      %427 = vmatpush1.msra.mxu0 0.0
      %428 = vmatprep.subr.mxu0 0.0
      %429 = vmatpush1.msra.mxu0 0.0
      %430 = vmatprep.subr.mxu0 0.0
      %431 = vmatpush1.msra.mxu0 0.0
      %432 = vmatprep.subr.mxu0 0.0
      %433 = vmatpush1.msra.mxu0 0.0
      %434 = vmatprep.subr.mxu0 0.0
      %435 = vmatpush1.msra.mxu0 0.0
      %436 = vmatprep.subr.mxu0 0.0
      %437 = vmatpush1.msra.mxu0 0.0
      %438 = vmatprep.subr.mxu0 0.0
      %439 = vmatpush1.msra.mxu0 0.0
      %440 = vmatprep.subr.mxu0 0.0
      %441 = vmatpush1.msra.mxu0 0.0
      %442 = vmatprep.subr.mxu0 0.0
      %443 = vmatpush1.msra.mxu0 0.0
      %444 = vmatprep.subr.mxu0 0.0
      %445 = vmatpush1.msra.mxu0 0.0
      %446 = vmatprep.subr.mxu0 0.0
      %447 = vmatpush1.msra.mxu0 0.0
      %448 = vmatprep.subr.mxu0 0.0
      %449 = vmatpush1.msra.mxu0 0.0
      %450 = vmatprep.subr.mxu0 0.0
      %451 = vmatpush1.msra.mxu0 0.0
      %452 = vmatprep.subr.mxu0 0.0
      %453 = vmatpush1.msra.mxu0 0.0
      %454 = vmatprep.subr.mxu0 0.0
      %455 = vmatpush1.msra.mxu0 0.0
      %456 = vmatprep.subr.mxu0 0.0
      %457 = vmatpush1.msra.mxu0 0.0
      %458 = vmatprep.subr.mxu0 0.0
      %459 = vmatpush1.msra.mxu0 0.0
      %460 = vmatprep.subr.mxu0 0.0
      %461 = vmatpush1.msra.mxu0 0.0
      %462 = vmatprep.subr.mxu0 0.0
      %463 = vmatpush1.msra.mxu0 0.0
      %464 = vmatprep.subr.mxu0 0.0
      %465 = vmatpush1.msra.mxu0 0.0
      %466 = vmatprep.subr.mxu0 0.0
      %467 = vmatpush1.msra.mxu0 0.0
      %468 = vmatprep.subr.mxu0 0.0
      %469 = vmatpush1.msra.mxu0 0.0
      %470 = vmatprep.subr.mxu0 0.0
      %471 = vmatpush1.msra.mxu0 0.0
      %472 = vmatprep.subr.mxu0 0.0
      %473 = vmatpush1.msra.mxu0 0.0
      %474 = vmatprep.subr.mxu0 0.0
      %475 = vmatpush1.msra.mxu0 0.0
      %476 = vmatprep.subr.mxu0 0.0
      %477 = vmatpush1.msra.mxu0 0.0
      %478 = vmatprep.subr.mxu0 0.0
      %479 = vmatpush1.msra.mxu0 0.0
      %480 = vmatprep.mubr.f32.mxu0 0.0
      %481 = vmatmul.mubr.f32.gmra.mrb[0].mxu0 %v403
      %v482 = vpop.f32.mrb[0].mxu0
      %v483 = vadd.f32 %v387, %v482
      %v484 = vpop.f32.mrb[0].mxu0
      %v485 = vadd.f32 %v387, %v484
      %486 = vmatprep.mubr.f32.mxu0 0.0
      %487 = vmatmul.mubr.f32.gmra.mrb[0].mxu0 %v406
      %v488 = vpop.f32.mrb[0].mxu0
      %v489 = vadd.f32 %v392, %v488
      %v490 = vpop.f32.mrb[0].mxu0
      %v491 = vadd.f32 %v392, %v490
      %492 = vmatprep.mubr.f32.mxu0 0.0
      %493 = vmatmul.mubr.f32.gmra.mrb[0].mxu0 %v409
      %v494 = vpop.f32.mrb[0].mxu0
      %v495 = vadd.f32 %v397, %v494
      %v496 = vpop.f32.mrb[0].mxu0
      %v497 = vadd.f32 %v397, %v496
      %498 = vdwg.mxu0
      %v499 = vmax.f32 %v483, 0.0
      %v500 = vmax.f32 %v485, 0.0
      %501 = vst [vmem:[%s359] sm:$0xff] %v499
      %502 = vst [vmem:[%s359 + $0x8] sm:$0xff] %v500
      %503 = vst [vmem:[#allocation2] sm:$0xf] -inf
      %504 = vst [vmem:[#allocation2 + $0xc] sm:$0xf] -inf
      %505 = vst [vmem:[#allocation2 + $0x4] sm:$0xff] %v360
      %v506 = vld [vmem:[#allocation2] sm:$0xff]
      %v507 = vld [vmem:[#allocation2 + $0x8] sm:$0xf]
      %v508 = vsel %vm369, 1, 0
      %v509 = vlaneseq
      %v510 = vshrl.u32 %v509, 7
      %v511 = vsub.s32 0, %v510
      %v512 = vrot.slane %v508, %v511
      %v513 = vlaneseq
      %v514 = vshrl.u32 %v513, 7
      %v515 = vsub.s32 1, %v514
      %v516 = vrot.slane %v508, %v515
      %vm517 = vcmp.eq.s32.totalorder %v512, 1
      %vm518 = vcmp.eq.s32.totalorder %v516, 1
      %v521 = vcombine.high %v506, %v506
      %522 = vrot.lane.b32.xlu0 %v506, 17
      %v523 = vpop.permute.xlu0 %522
      %524 = vrot.lane.b32.xlu0 %v521, 17
      %v525 = vpop.permute.xlu0 %524
      %526 = vrot.lane.b32.xlu0 %v507, 17
      %v527 = vpop.permute.xlu0 %526
      %vm528 = vcmask 138240
      %v529 = vsel %vm528, %v523, %v525
      %v530 = vsel %vm528, %v525, %v527
      %v533 = vsel %vm517, %v529, -inf
      %v534 = vsel %vm518, %v530, -inf
      %535 = vrot.lane.b32.xlu0 %v506, 16
      %v536 = vpop.permute.xlu0 %535
      %537 = vrot.lane.b32.xlu0 %v521, 16
      %v538 = vpop.permute.xlu0 %537
      %539 = vrot.lane.b32.xlu0 %v507, 16
      %v540 = vpop.permute.xlu0 %539
      %vm541 = vcmask 130048
      %v542 = vsel %vm541, %v536, %v538
      %v543 = vsel %vm541, %v538, %v540
      %v546 = vmax.f32 %v533, %v542
      %v547 = vmax.f32 %v534, %v543
      %v548 = vsel %vm373, 1, 0
      %v549 = vlaneseq
      %v550 = vshrl.u32 %v549, 7
      %v551 = vsub.s32 0, %v550
      %v552 = vrot.slane %v548, %v551
      %v553 = vlaneseq
      %v554 = vshrl.u32 %v553, 7
      %v555 = vsub.s32 1, %v554
      %v556 = vrot.slane %v548, %v555
      %vm557 = vcmp.eq.s32.totalorder %v552, 1
      %vm558 = vcmp.eq.s32.totalorder %v556, 1
      %559 = vrot.lane.b32.xlu0 %v506, 15
      %v560 = vpop.permute.xlu0 %559
      %561 = vrot.lane.b32.xlu0 %v521, 15
      %v562 = vpop.permute.xlu0 %561
      %563 = vrot.lane.b32.xlu0 %v507, 15
      %v564 = vpop.permute.xlu0 %563
      %vm565 = vcmask 121856
      %v566 = vsel %vm565, %v560, %v562
      %v567 = vsel %vm565, %v562, %v564
      %v570 = vsel %vm557, %v566, -inf
      %v571 = vsel %vm558, %v567, -inf
      %v572 = vmax.f32 %v546, %v570
      %v573 = vmax.f32 %v547, %v571
      %574 = vrot.lane.b32.xlu0 %v506, 1
      %v575 = vpop.permute.xlu0 %574
      %576 = vrot.lane.b32.xlu0 %v521, 1
      %v577 = vpop.permute.xlu0 %576
      %578 = vrot.lane.b32.xlu0 %v507, 1
      %v579 = vpop.permute.xlu0 %578
      %vm580 = vcmask 7168
      %v581 = vsel %vm580, %v575, %v577
      %v582 = vsel %vm580, %v577, %v579
      %v585 = vsel %vm517, %v581, -inf
      %v586 = vsel %vm518, %v582, -inf
      %v587 = vmax.f32 %v572, %v585
      %v588 = vmax.f32 %v573, %v586
      %v589 = vld [vmem:[#allocation2 + $0x4] sm:$0xff]
      %v591 = vcombine.high %v589, %v589
      %v593 = vmax.f32 %v587, %v589
      %v594 = vmax.f32 %v588, %v591
      %v595 = vld [vmem:[#allocation2 + $0x4] sm:$0xff]
      %v596 = vld [vmem:[#allocation2 + $0xc] sm:$0xf]
      %v599 = vcombine.high %v595, %v595
      %600 = vrot.lane.b32.xlu0 %v595, 127
      %v601 = vpop.permute.xlu0 %600
      %602 = vrot.lane.b32.xlu0 %v599, 127
      %v603 = vpop.permute.xlu0 %602
      %604 = vrot.lane.b32.xlu0 %v596, 127
      %v605 = vpop.permute.xlu0 %604
      %vm606 = vcmask 1039360
      %v607 = vsel %vm606, %v601, %v603
      %v608 = vsel %vm606, %v603, %v605
      %v611 = vsel %vm557, %v607, -inf
      %v612 = vsel %vm558, %v608, -inf
      %v613 = vmax.f32 %v593, %v611
      %v614 = vmax.f32 %v594, %v612
      %615 = vrot.lane.b32.xlu0 %v595, 113
      %v616 = vpop.permute.xlu0 %615
      %617 = vrot.lane.b32.xlu0 %v599, 113
      %v618 = vpop.permute.xlu0 %617
      %619 = vrot.lane.b32.xlu0 %v596, 113
      %v620 = vpop.permute.xlu0 %619
      %vm621 = vcmask 924672
      %v622 = vsel %vm621, %v616, %v618
      %v623 = vsel %vm621, %v618, %v620
      %v626 = vsel %vm517, %v622, -inf
      %v627 = vsel %vm518, %v623, -inf
      %v628 = vmax.f32 %v613, %v626
      %v629 = vmax.f32 %v614, %v627
      %630 = vrot.lane.b32.xlu0 %v595, 112
      %v631 = vpop.permute.xlu0 %630
      %632 = vrot.lane.b32.xlu0 %v599, 112
      %v633 = vpop.permute.xlu0 %632
      %634 = vrot.lane.b32.xlu0 %v596, 112
      %v635 = vpop.permute.xlu0 %634
      %vm636 = vcmask 916480
      %v637 = vsel %vm636, %v631, %v633
      %v638 = vsel %vm636, %v633, %v635
      %v641 = vmax.f32 %v628, %v637
      %v642 = vmax.f32 %v629, %v638
      %643 = vrot.lane.b32.xlu0 %v595, 111
      %v644 = vpop.permute.xlu0 %643
      %645 = vrot.lane.b32.xlu0 %v599, 111
      %v646 = vpop.permute.xlu0 %645
      %647 = vrot.lane.b32.xlu0 %v596, 111
      %v648 = vpop.permute.xlu0 %647
      %vm649 = vcmask 908288
      %v650 = vsel %vm649, %v644, %v646
      %v651 = vsel %vm649, %v646, %v648
      %v654 = vsel %vm557, %v650, -inf
      %v655 = vsel %vm558, %v651, -inf
      %v656 = vmax.f32 %v641, %v654
      %v657 = vmax.f32 %v642, %v655
      %v658 = vld [vmem:[%s4] sm:$0xff]
      %v659 = vld [vmem:[%s5] sm:$0xff]
      %661 = vset.pattern.permute.xlu0 0
      %662 = vperm.xlu0 %661, %v659
      %v663 = vpop.permute.xlu0 %662
      %v666 = vsel %vm401, %v658, 0
      %v669 = vsel %vm411, %v656, 0
      %v672 = vsel %vm411, %v657, 0
      %674 = vmatprep.subr.mxu0 %v672
      %675 = vmatpush1.msra.mxu0 %v669
      %676 = vmatprep.subr.mxu0 0.0
      %677 = vmatpush1.msra.mxu0 0.0
      %678 = vmatprep.subr.mxu0 0.0
      %679 = vmatpush1.msra.mxu0 0.0
      %680 = vmatprep.subr.mxu0 0.0
      %681 = vmatpush1.msra.mxu0 0.0
      %682 = vmatprep.subr.mxu0 0.0
      %683 = vmatpush1.msra.mxu0 0.0
      %684 = vmatprep.subr.mxu0 0.0
      %685 = vmatpush1.msra.mxu0 0.0
      %686 = vmatprep.subr.mxu0 0.0
      %687 = vmatpush1.msra.mxu0 0.0
      %688 = vmatprep.subr.mxu0 0.0
      %689 = vmatpush1.msra.mxu0 0.0
      %690 = vmatprep.subr.mxu0 0.0
      %691 = vmatpush1.msra.mxu0 0.0
      %692 = vmatprep.subr.mxu0 0.0
      %693 = vmatpush1.msra.mxu0 0.0
      %694 = vmatprep.subr.mxu0 0.0
      %695 = vmatpush1.msra.mxu0 0.0
      %696 = vmatprep.subr.mxu0 0.0
      %697 = vmatpush1.msra.mxu0 0.0
      %698 = vmatprep.subr.mxu0 0.0
      %699 = vmatpush1.msra.mxu0 0.0
      %700 = vmatprep.subr.mxu0 0.0
      %701 = vmatpush1.msra.mxu0 0.0
      %702 = vmatprep.subr.mxu0 0.0
      %703 = vmatpush1.msra.mxu0 0.0
      %704 = vmatprep.subr.mxu0 0.0
      %705 = vmatpush1.msra.mxu0 0.0
      %706 = vmatprep.subr.mxu0 0.0
      %707 = vmatpush1.msra.mxu0 0.0
      %708 = vmatprep.subr.mxu0 0.0
      %709 = vmatpush1.msra.mxu0 0.0
      %710 = vmatprep.subr.mxu0 0.0
      %711 = vmatpush1.msra.mxu0 0.0
      %712 = vmatprep.subr.mxu0 0.0
      %713 = vmatpush1.msra.mxu0 0.0
      %714 = vmatprep.subr.mxu0 0.0
      %715 = vmatpush1.msra.mxu0 0.0
      %716 = vmatprep.subr.mxu0 0.0
      %717 = vmatpush1.msra.mxu0 0.0
      %718 = vmatprep.subr.mxu0 0.0
      %719 = vmatpush1.msra.mxu0 0.0
      %720 = vmatprep.subr.mxu0 0.0
      %721 = vmatpush1.msra.mxu0 0.0
      %722 = vmatprep.subr.mxu0 0.0
      %723 = vmatpush1.msra.mxu0 0.0
      %724 = vmatprep.subr.mxu0 0.0
      %725 = vmatpush1.msra.mxu0 0.0
      %726 = vmatprep.subr.mxu0 0.0
      %727 = vmatpush1.msra.mxu0 0.0
      %728 = vmatprep.subr.mxu0 0.0
      %729 = vmatpush1.msra.mxu0 0.0
      %730 = vmatprep.subr.mxu0 0.0
      %731 = vmatpush1.msra.mxu0 0.0
      %732 = vmatprep.subr.mxu0 0.0
      %733 = vmatpush1.msra.mxu0 0.0
      %734 = vmatprep.subr.mxu0 0.0
      %735 = vmatpush1.msra.mxu0 0.0
      %736 = vmatprep.subr.mxu0 0.0
      %737 = vmatpush1.msra.mxu0 0.0
      %738 = vmatprep.mubr.f32.mxu0 0.0
      %739 = vmatmul.mubr.f32.gmra.mrb[0].mxu0 %v666
      %v740 = vpop.f32.mrb[0].mxu0
      %v741 = vadd.f32 %v663, %v740
      %v742 = vpop.f32.mrb[0].mxu0
      %v743 = vadd.f32 %v663, %v742
      %744 = vdwg.mxu0
      %v745 = vmax.f32 %v741, 0.0
      %v746 = vmax.f32 %v743, 0.0
      %747 = vst [vmem:[%s359 + $0x40] sm:$0xff] %v745
      %748 = vst [vmem:[%s359 + $0x48] sm:$0xff] %v746
      %749 = vst [vmem:[#allocation3] sm:$0xff] 0.0
      %750 = vst [vmem:[#allocation3 + $0x18] sm:$0xff] 0.0
      %751 = vst [vmem:[#allocation3 + $0x8] sm:$0xff] %v489
      %752 = vst [vmem:[#allocation3 + $0x10] sm:$0xff] %v491
      %v753 = vld [vmem:[#allocation3] sm:$0xff]
      %v754 = vld [vmem:[#allocation3 + $0x8] sm:$0xff]
      %v755 = vld [vmem:[#allocation3 + $0x10] sm:$0xff]
      %759 = vrot.lane.b32.xlu0 %v753, 17
      %v760 = vpop.permute.xlu0 %759
      %761 = vrot.lane.b32.xlu0 %v754, 17
      %v762 = vpop.permute.xlu0 %761
      %763 = vrot.lane.b32.xlu0 %v755, 17
      %v764 = vpop.permute.xlu0 %763
      %v765 = vsel %vm528, %v760, %v762
      %v766 = vsel %vm528, %v762, %v764
      %v769 = vsel %vm517, %v765, 0.0
      %v770 = vsel %vm518, %v766, 0.0
      %771 = vst [vmem:[#allocation5] sm:$0xff] %v769
      %772 = vst [vmem:[#allocation5 + $0x8] sm:$0xff] %v770
      %v773 = vld [vmem:[#allocation3] sm:$0xff]
      %v774 = vld [vmem:[#allocation3 + $0x8] sm:$0xff]
      %v775 = vld [vmem:[#allocation3 + $0x10] sm:$0xff]
      %779 = vrot.lane.b32.xlu0 %v773, 16
      %v780 = vpop.permute.xlu0 %779
      %781 = vrot.lane.b32.xlu0 %v774, 16
      %v782 = vpop.permute.xlu0 %781
      %783 = vrot.lane.b32.xlu0 %v775, 16
      %v784 = vpop.permute.xlu0 %783
      %v785 = vsel %vm541, %v780, %v782
      %v786 = vsel %vm541, %v782, %v784
      %789 = vst [vmem:[#allocation5 + $0x10] sm:$0xff] %v785
      %790 = vst [vmem:[#allocation5 + $0x18] sm:$0xff] %v786
      %v791 = vld [vmem:[#allocation3] sm:$0xff]
      %v792 = vld [vmem:[#allocation3 + $0x8] sm:$0xff]
      %v793 = vld [vmem:[#allocation3 + $0x10] sm:$0xff]
      %797 = vrot.lane.b32.xlu0 %v791, 15
      %v798 = vpop.permute.xlu0 %797
      %799 = vrot.lane.b32.xlu0 %v792, 15
      %v800 = vpop.permute.xlu0 %799
      %801 = vrot.lane.b32.xlu0 %v793, 15
      %v802 = vpop.permute.xlu0 %801
      %v803 = vsel %vm565, %v798, %v800
      %v804 = vsel %vm565, %v800, %v802
      %v807 = vsel %vm557, %v803, 0.0
      %v808 = vsel %vm558, %v804, 0.0
      %809 = vst [vmem:[#allocation5 + $0x20] sm:$0xff] %v807
      %810 = vst [vmem:[#allocation5 + $0x28] sm:$0xff] %v808
      %v811 = vld [vmem:[#allocation3] sm:$0xff]
      %v812 = vld [vmem:[#allocation3 + $0x8] sm:$0xff]
      %v813 = vld [vmem:[#allocation3 + $0x10] sm:$0xff]
      %817 = vrot.lane.b32.xlu0 %v811, 1
      %v818 = vpop.permute.xlu0 %817
      %819 = vrot.lane.b32.xlu0 %v812, 1
      %v820 = vpop.permute.xlu0 %819
      %821 = vrot.lane.b32.xlu0 %v813, 1
      %v822 = vpop.permute.xlu0 %821
      %v823 = vsel %vm580, %v818, %v820
      %v824 = vsel %vm580, %v820, %v822
      %v827 = vsel %vm517, %v823, 0.0
      %v828 = vsel %vm518, %v824, 0.0
      %829 = vst [vmem:[#allocation5 + $0x30] sm:$0xff] %v827
      %830 = vst [vmem:[#allocation5 + $0x38] sm:$0xff] %v828
      %v831 = vld [vmem:[#allocation3 + $0x8] sm:$0xff]
      %v832 = vld [vmem:[#allocation3 + $0x10] sm:$0xff]
      %833 = vst [vmem:[#allocation5 + $0x40] sm:$0xff] %v831
      %834 = vst [vmem:[#allocation5 + $0x48] sm:$0xff] %v832
      %v835 = vld [vmem:[#allocation3 + $0x8] sm:$0xff]
      %v836 = vld [vmem:[#allocation3 + $0x10] sm:$0xff]
      %v837 = vld [vmem:[#allocation3 + $0x18] sm:$0xff]
      %841 = vrot.lane.b32.xlu0 %v835, 127
      %v842 = vpop.permute.xlu0 %841
      %843 = vrot.lane.b32.xlu0 %v836, 127
      %v844 = vpop.permute.xlu0 %843
      %845 = vrot.lane.b32.xlu0 %v837, 127
      %v846 = vpop.permute.xlu0 %845
      %v847 = vsel %vm606, %v842, %v844
      %v848 = vsel %vm606, %v844, %v846
      %v851 = vsel %vm557, %v847, 0.0
      %v852 = vsel %vm558, %v848, 0.0
      %853 = vst [vmem:[#allocation5 + $0x50] sm:$0xff] %v851
      %854 = vst [vmem:[#allocation5 + $0x58] sm:$0xff] %v852
      %v855 = vld [vmem:[#allocation3 + $0x8] sm:$0xff]
      %v856 = vld [vmem:[#allocation3 + $0x10] sm:$0xff]
      %v857 = vld [vmem:[#allocation3 + $0x18] sm:$0xff]
      %861 = vrot.lane.b32.xlu0 %v855, 113
      %v862 = vpop.permute.xlu0 %861
      %863 = vrot.lane.b32.xlu0 %v856, 113
      %v864 = vpop.permute.xlu0 %863
      %865 = vrot.lane.b32.xlu0 %v857, 113
      %v866 = vpop.permute.xlu0 %865
      %v867 = vsel %vm621, %v862, %v864
      %v868 = vsel %vm621, %v864, %v866
      %v871 = vsel %vm517, %v867, 0.0
      %v872 = vsel %vm518, %v868, 0.0
      %873 = vst [vmem:[#allocation5 + $0x60] sm:$0xff] %v871
      %874 = vst [vmem:[#allocation5 + $0x68] sm:$0xff] %v872
      %v875 = vld [vmem:[#allocation3 + $0x8] sm:$0xff]
      %v876 = vld [vmem:[#allocation3 + $0x10] sm:$0xff]
      %v877 = vld [vmem:[#allocation3 + $0x18] sm:$0xff]
      %881 = vrot.lane.b32.xlu0 %v875, 112
      %v882 = vpop.permute.xlu0 %881
      %883 = vrot.lane.b32.xlu0 %v876, 112
      %v884 = vpop.permute.xlu0 %883
      %885 = vrot.lane.b32.xlu0 %v877, 112
      %v886 = vpop.permute.xlu0 %885
      %v887 = vsel %vm636, %v882, %v884
      %v888 = vsel %vm636, %v884, %v886
      %891 = vst [vmem:[#allocation5 + $0x70] sm:$0xff] %v887
      %892 = vst [vmem:[#allocation5 + $0x78] sm:$0xff] %v888
      %v893 = vld [vmem:[#allocation3 + $0x8] sm:$0xff]
      %v894 = vld [vmem:[#allocation3 + $0x10] sm:$0xff]
      %v895 = vld [vmem:[#allocation3 + $0x18] sm:$0xff]
      %899 = vrot.lane.b32.xlu0 %v893, 111
      %v900 = vpop.permute.xlu0 %899
      %901 = vrot.lane.b32.xlu0 %v894, 111
      %v902 = vpop.permute.xlu0 %901
      %903 = vrot.lane.b32.xlu0 %v895, 111
      %v904 = vpop.permute.xlu0 %903
      %v905 = vsel %vm649, %v900, %v902
      %v906 = vsel %vm649, %v902, %v904
      %v909 = vsel %vm557, %v905, 0.0
      %v910 = vsel %vm558, %v906, 0.0
      %911 = vst [vmem:[#allocation5 + $0x80] sm:$0xff] %v909
      %912 = vst [vmem:[#allocation5 + $0x88] sm:$0xff] %v910
      %v913 = vld [vmem:[%s6] sm:$0xff]
      %v914 = vld [vmem:[%s6 + $0x8] sm:$0xff]
      %v915 = vld [vmem:[#allocation5] sm:$0xff]
      %v916 = vld [vmem:[#allocation5 + $0x8] sm:$0xff]
      %v917 = vld [vmem:[#allocation5 + $0x10] sm:$0xff]
      %v918 = vld [vmem:[#allocation5 + $0x18] sm:$0xff]
      %v919 = vld [vmem:[#allocation5 + $0x20] sm:$0xff]
      %v920 = vld [vmem:[#allocation5 + $0x28] sm:$0xff]
      %v921 = vld [vmem:[#allocation5 + $0x30] sm:$0xff]
      %v922 = vld [vmem:[#allocation5 + $0x38] sm:$0xff]
      %v923 = vld [vmem:[#allocation5 + $0x40] sm:$0xff]
      %v924 = vld [vmem:[#allocation5 + $0x48] sm:$0xff]
      %v925 = vld [vmem:[#allocation5 + $0x50] sm:$0xff]
      %v926 = vld [vmem:[#allocation5 + $0x58] sm:$0xff]
      %v927 = vld [vmem:[#allocation5 + $0x60] sm:$0xff]
      %v928 = vld [vmem:[#allocation5 + $0x68] sm:$0xff]
      %v929 = vld [vmem:[#allocation5 + $0x70] sm:$0xff]
      %v930 = vld [vmem:[#allocation5 + $0x78] sm:$0xff]
      %v931 = vld [vmem:[#allocation5 + $0x80] sm:$0xff]
      %v932 = vld [vmem:[#allocation5 + $0x88] sm:$0xff]
      %v933 = vld [vmem:[%s7] sm:$0xff]
      %v934 = vld [vmem:[%s7 + $0x8] sm:$0xff]
      %936 = vset.pattern.permute.xlu0 0
      %937 = vperm.xlu0 %936, %v933
      %v938 = vpop.permute.xlu0 %937
      %941 = vset.pattern.permute.xlu0 0
      %942 = vperm.xlu0 %941, %v934
      %v943 = vpop.permute.xlu0 %942
      %vm945 = vcmask 588800
      %v947 = vsel %vm945, %v913, 0
      %v950 = vsel %vm945, %v914, 0
      %952 = vmatprep.subr.mxu0 %v916
      %953 = vmatpush1.msra.mxu0 %v915
      %954 = vmatprep.subr.mxu0 %v918
      %955 = vmatpush1.msra.mxu0 %v917
      %956 = vmatprep.subr.mxu0 %v920
      %957 = vmatpush1.msra.mxu0 %v919
      %958 = vmatprep.subr.mxu0 %v922
      %959 = vmatpush1.msra.mxu0 %v921
      %960 = vmatprep.subr.mxu0 %v924
      %961 = vmatpush1.msra.mxu0 %v923
      %962 = vmatprep.subr.mxu0 %v926
      %963 = vmatpush1.msra.mxu0 %v925
      %964 = vmatprep.subr.mxu0 %v928
      %965 = vmatpush1.msra.mxu0 %v927
      %966 = vmatprep.subr.mxu0 %v930
      %967 = vmatpush1.msra.mxu0 %v929
      %968 = vmatprep.subr.mxu0 %v932
      %969 = vmatpush1.msra.mxu0 %v931
      %970 = vmatprep.subr.mxu0 0.0
      %971 = vmatpush1.msra.mxu0 0.0
      %972 = vmatprep.subr.mxu0 0.0
      %973 = vmatpush1.msra.mxu0 0.0
      %974 = vmatprep.subr.mxu0 0.0
      %975 = vmatpush1.msra.mxu0 0.0
      %976 = vmatprep.subr.mxu0 0.0
      %977 = vmatpush1.msra.mxu0 0.0
      %978 = vmatprep.subr.mxu0 0.0
      %979 = vmatpush1.msra.mxu0 0.0
      %980 = vmatprep.subr.mxu0 0.0
      %981 = vmatpush1.msra.mxu0 0.0
      %982 = vmatprep.subr.mxu0 0.0
      %983 = vmatpush1.msra.mxu0 0.0
      %984 = vmatprep.subr.mxu0 0.0
      %985 = vmatpush1.msra.mxu0 0.0
      %986 = vmatprep.subr.mxu0 0.0
      %987 = vmatpush1.msra.mxu0 0.0
      %988 = vmatprep.subr.mxu0 0.0
      %989 = vmatpush1.msra.mxu0 0.0
      %990 = vmatprep.subr.mxu0 0.0
      %991 = vmatpush1.msra.mxu0 0.0
      %992 = vmatprep.subr.mxu0 0.0
      %993 = vmatpush1.msra.mxu0 0.0
      %994 = vmatprep.subr.mxu0 0.0
      %995 = vmatpush1.msra.mxu0 0.0
      %996 = vmatprep.subr.mxu0 0.0
      %997 = vmatpush1.msra.mxu0 0.0
      %998 = vmatprep.subr.mxu0 0.0
      %999 = vmatpush1.msra.mxu0 0.0
      %1000 = vmatprep.subr.mxu0 0.0
      %1001 = vmatpush1.msra.mxu0 0.0
      %1002 = vmatprep.subr.mxu0 0.0
      %1003 = vmatpush1.msra.mxu0 0.0
      %1004 = vmatprep.subr.mxu0 0.0
      %1005 = vmatpush1.msra.mxu0 0.0
      %1006 = vmatprep.subr.mxu0 0.0
      %1007 = vmatpush1.msra.mxu0 0.0
      %1008 = vmatprep.subr.mxu0 0.0
      %1009 = vmatpush1.msra.mxu0 0.0
      %1010 = vmatprep.subr.mxu0 0.0
      %1011 = vmatpush1.msra.mxu0 0.0
      %1012 = vmatprep.subr.mxu0 0.0
      %1013 = vmatpush1.msra.mxu0 0.0
      %1014 = vmatprep.subr.mxu0 0.0
      %1015 = vmatpush1.msra.mxu0 0.0
      %1016 = vmatprep.mubr.f32.mxu0 0.0
      %1017 = vmatmul.mubr.f32.gmra.mrb[0].mxu0 %v947
      %v1018 = vpop.f32.mrb[0].mxu0
      %v1019 = vadd.f32 %v938, %v1018
      %v1020 = vpop.f32.mrb[0].mxu0
      %v1021 = vadd.f32 %v938, %v1020
      %1022 = vmatprep.mubr.f32.mxu0 0.0
      %1023 = vmatmul.mubr.f32.gmra.mrb[0].mxu0 %v950
      %v1024 = vpop.f32.mrb[0].mxu0
      %v1025 = vadd.f32 %v943, %v1024
      %v1026 = vpop.f32.mrb[0].mxu0
      %v1027 = vadd.f32 %v943, %v1026
      %1028 = vdwg.mxu0
      %v1029 = vmax.f32 %v1019, 0.0
      %v1030 = vmax.f32 %v1021, 0.0
      %v1031 = vmax.f32 %v1025, 0.0
      %v1032 = vmax.f32 %v1027, 0.0
      %1033 = vst [vmem:[%s359 + $0x10] sm:$0xff] %v1029
      %1034 = vst [vmem:[%s359 + $0x18] sm:$0xff] %v1030
      %1035 = vst [vmem:[%s359 + $0x20] sm:$0xff] %v1031
      %1036 = vst [vmem:[%s359 + $0x28] sm:$0xff] %v1032
      %1037 = vst [vmem:[#allocation4] sm:$0xff] 0.0
      %1038 = vst [vmem:[#allocation4 + $0x18] sm:$0xff] 0.0
      %1039 = vst [vmem:[#allocation4 + $0x8] sm:$0xff] %v495
      %1040 = vst [vmem:[#allocation4 + $0x10] sm:$0xff] %v497
      %v1041 = vld [vmem:[#allocation4] sm:$0xff]
      %v1042 = vld [vmem:[#allocation4 + $0x8] sm:$0xff]
      %v1043 = vld [vmem:[#allocation4 + $0x10] sm:$0xff]
      %v1044 = vsel %vm365, 1, 0
      %v1045 = vlaneseq
      %v1046 = vshrl.u32 %v1045, 7
      %v1047 = vsub.s32 0, %v1046
      %v1048 = vrot.slane %v1044, %v1047
      %v1049 = vlaneseq
      %v1050 = vshrl.u32 %v1049, 7
      %v1051 = vsub.s32 1, %v1050
      %v1052 = vrot.slane %v1044, %v1051
      %vm1053 = vcmp.eq.s32.totalorder %v1048, 1
      %vm1054 = vcmp.eq.s32.totalorder %v1052, 1
      %1058 = vrot.lane.b32.xlu0 %v1041, 34
      %v1059 = vpop.permute.xlu0 %1058
      %1060 = vrot.lane.b32.xlu0 %v1042, 34
      %v1061 = vpop.permute.xlu0 %1060
      %1062 = vrot.lane.b32.xlu0 %v1043, 34
      %v1063 = vpop.permute.xlu0 %1062
      %vm1064 = vcmask 277504
      %v1065 = vsel %vm1064, %v1059, %v1061
      %v1066 = vsel %vm1064, %v1061, %v1063
      %v1069 = vsel %vm1053, %v1065, 0.0
      %v1070 = vsel %vm1054, %v1066, 0.0
      %1071 = vst [vmem:[#allocation6] sm:$0xff] %v1069
      %1072 = vst [vmem:[#allocation6 + $0x8] sm:$0xff] %v1070
      %v1073 = vld [vmem:[#allocation4] sm:$0xff]
      %v1074 = vld [vmem:[#allocation4 + $0x8] sm:$0xff]
      %v1075 = vld [vmem:[#allocation4 + $0x10] sm:$0xff]
      %1079 = vrot.lane.b32.xlu0 %v1073, 33
      %v1080 = vpop.permute.xlu0 %1079
      %1081 = vrot.lane.b32.xlu0 %v1074, 33
      %v1082 = vpop.permute.xlu0 %1081
      %1083 = vrot.lane.b32.xlu0 %v1075, 33
      %v1084 = vpop.permute.xlu0 %1083
      %vm1085 = vcmask 269312
      %v1086 = vsel %vm1085, %v1080, %v1082
      %v1087 = vsel %vm1085, %v1082, %v1084
      %v1090 = vsel %vm517, %v1086, 0.0
      %v1091 = vsel %vm518, %v1087, 0.0
      %1092 = vst [vmem:[#allocation6 + $0x10] sm:$0xff] %v1090
      %1093 = vst [vmem:[#allocation6 + $0x18] sm:$0xff] %v1091
      %v1094 = vld [vmem:[#allocation4] sm:$0xff]
      %v1095 = vld [vmem:[#allocation4 + $0x8] sm:$0xff]
      %v1096 = vld [vmem:[#allocation4 + $0x10] sm:$0xff]
      %1100 = vrot.lane.b32.xlu0 %v1094, 32
      %v1101 = vpop.permute.xlu0 %1100
      %1102 = vrot.lane.b32.xlu0 %v1095, 32
      %v1103 = vpop.permute.xlu0 %1102
      %1104 = vrot.lane.b32.xlu0 %v1096, 32
      %v1105 = vpop.permute.xlu0 %1104
      %vm1106 = vcmask 261120
      %v1107 = vsel %vm1106, %v1101, %v1103
      %v1108 = vsel %vm1106, %v1103, %v1105
      %1111 = vst [vmem:[#allocation6 + $0x20] sm:$0xff] %v1107
      %1112 = vst [vmem:[#allocation6 + $0x28] sm:$0xff] %v1108
      %v1113 = vld [vmem:[#allocation4] sm:$0xff]
      %v1114 = vld [vmem:[#allocation4 + $0x8] sm:$0xff]
      %v1115 = vld [vmem:[#allocation4 + $0x10] sm:$0xff]
      %1119 = vrot.lane.b32.xlu0 %v1113, 31
      %v1120 = vpop.permute.xlu0 %1119
      %1121 = vrot.lane.b32.xlu0 %v1114, 31
      %v1122 = vpop.permute.xlu0 %1121
      %1123 = vrot.lane.b32.xlu0 %v1115, 31
      %v1124 = vpop.permute.xlu0 %1123
      %vm1125 = vcmask 252928
      %v1126 = vsel %vm1125, %v1120, %v1122
      %v1127 = vsel %vm1125, %v1122, %v1124
      %v1130 = vsel %vm557, %v1126, 0.0
      %v1131 = vsel %vm558, %v1127, 0.0
      %1132 = vst [vmem:[#allocation6 + $0x30] sm:$0xff] %v1130
      %1133 = vst [vmem:[#allocation6 + $0x38] sm:$0xff] %v1131
      %v1134 = vld [vmem:[#allocation4] sm:$0xff]
      %v1135 = vld [vmem:[#allocation4 + $0x8] sm:$0xff]
      %v1136 = vld [vmem:[#allocation4 + $0x10] sm:$0xff]
      %v1137 = vsel %vm377, 1, 0
      %v1138 = vlaneseq
      %v1139 = vshrl.u32 %v1138, 7
      %v1140 = vsub.s32 0, %v1139
      %v1141 = vrot.slane %v1137, %v1140
      %v1142 = vlaneseq
      %v1143 = vshrl.u32 %v1142, 7
      %v1144 = vsub.s32 1, %v1143
      %v1145 = vrot.slane %v1137, %v1144
      %vm1146 = vcmp.eq.s32.totalorder %v1141, 1
      %vm1147 = vcmp.eq.s32.totalorder %v1145, 1
      %1151 = vrot.lane.b32.xlu0 %v1134, 30
      %v1152 = vpop.permute.xlu0 %1151
      %1153 = vrot.lane.b32.xlu0 %v1135, 30
      %v1154 = vpop.permute.xlu0 %1153
      %1155 = vrot.lane.b32.xlu0 %v1136, 30
      %v1156 = vpop.permute.xlu0 %1155
      %vm1157 = vcmask 244736
      %v1158 = vsel %vm1157, %v1152, %v1154
      %v1159 = vsel %vm1157, %v1154, %v1156
      %v1162 = vsel %vm1146, %v1158, 0.0
      %v1163 = vsel %vm1147, %v1159, 0.0
      %1164 = vst [vmem:[#allocation6 + $0x40] sm:$0xff] %v1162
      %1165 = vst [vmem:[#allocation6 + $0x48] sm:$0xff] %v1163
      %v1166 = vld [vmem:[#allocation4] sm:$0xff]
      %v1167 = vld [vmem:[#allocation4 + $0x8] sm:$0xff]
      %v1168 = vld [vmem:[#allocation4 + $0x10] sm:$0xff]
      %1172 = vrot.lane.b32.xlu0 %v1166, 18
      %v1173 = vpop.permute.xlu0 %1172
      %1174 = vrot.lane.b32.xlu0 %v1167, 18
      %v1175 = vpop.permute.xlu0 %1174
      %1176 = vrot.lane.b32.xlu0 %v1168, 18
      %v1177 = vpop.permute.xlu0 %1176
      %vm1178 = vcmask 146432
      %v1179 = vsel %vm1178, %v1173, %v1175
      %v1180 = vsel %vm1178, %v1175, %v1177
      %v1183 = vsel %vm1053, %v1179, 0.0
      %v1184 = vsel %vm1054, %v1180, 0.0
      %1185 = vst [vmem:[#allocation6 + $0x50] sm:$0xff] %v1183
      %1186 = vst [vmem:[#allocation6 + $0x58] sm:$0xff] %v1184
      %v1187 = vld [vmem:[#allocation4] sm:$0xff]
      %v1188 = vld [vmem:[#allocation4 + $0x8] sm:$0xff]
      %v1189 = vld [vmem:[#allocation4 + $0x10] sm:$0xff]
      %1193 = vrot.lane.b32.xlu0 %v1187, 17
      %v1194 = vpop.permute.xlu0 %1193
      %1195 = vrot.lane.b32.xlu0 %v1188, 17
      %v1196 = vpop.permute.xlu0 %1195
      %1197 = vrot.lane.b32.xlu0 %v1189, 17
      %v1198 = vpop.permute.xlu0 %1197
      %v1199 = vsel %vm528, %v1194, %v1196
      %v1200 = vsel %vm528, %v1196, %v1198
      %v1203 = vsel %vm517, %v1199, 0.0
      %v1204 = vsel %vm518, %v1200, 0.0
      %1205 = vst [vmem:[#allocation6 + $0x60] sm:$0xff] %v1203
      %1206 = vst [vmem:[#allocation6 + $0x68] sm:$0xff] %v1204
      %v1207 = vld [vmem:[#allocation4] sm:$0xff]
      %v1208 = vld [vmem:[#allocation4 + $0x8] sm:$0xff]
      %v1209 = vld [vmem:[#allocation4 + $0x10] sm:$0xff]
      %1213 = vrot.lane.b32.xlu0 %v1207, 16
      %v1214 = vpop.permute.xlu0 %1213
      %1215 = vrot.lane.b32.xlu0 %v1208, 16
      %v1216 = vpop.permute.xlu0 %1215
      %1217 = vrot.lane.b32.xlu0 %v1209, 16
      %v1218 = vpop.permute.xlu0 %1217
      %v1219 = vsel %vm541, %v1214, %v1216
      %v1220 = vsel %vm541, %v1216, %v1218
      %1223 = vst [vmem:[#allocation6 + $0x70] sm:$0xff] %v1219
      %1224 = vst [vmem:[#allocation6 + $0x78] sm:$0xff] %v1220
      %v1225 = vld [vmem:[#allocation4] sm:$0xff]
      %v1226 = vld [vmem:[#allocation4 + $0x8] sm:$0xff]
      %v1227 = vld [vmem:[#allocation4 + $0x10] sm:$0xff]
      %1231 = vrot.lane.b32.xlu0 %v1225, 15
      %v1232 = vpop.permute.xlu0 %1231
      %1233 = vrot.lane.b32.xlu0 %v1226, 15
      %v1234 = vpop.permute.xlu0 %1233
      %1235 = vrot.lane.b32.xlu0 %v1227, 15
      %v1236 = vpop.permute.xlu0 %1235
      %v1237 = vsel %vm565, %v1232, %v1234
      %v1238 = vsel %vm565, %v1234, %v1236
      %v1241 = vsel %vm557, %v1237, 0.0
      %v1242 = vsel %vm558, %v1238, 0.0
      %1243 = vst [vmem:[#allocation6 + $0x80] sm:$0xff] %v1241
      %1244 = vst [vmem:[#allocation6 + $0x88] sm:$0xff] %v1242
      %v1245 = vld [vmem:[#allocation4] sm:$0xff]
      %v1246 = vld [vmem:[#allocation4 + $0x8] sm:$0xff]
      %v1247 = vld [vmem:[#allocation4 + $0x10] sm:$0xff]
      %1251 = vrot.lane.b32.xlu0 %v1245, 14
      %v1252 = vpop.permute.xlu0 %1251
      %1253 = vrot.lane.b32.xlu0 %v1246, 14
      %v1254 = vpop.permute.xlu0 %1253
      %1255 = vrot.lane.b32.xlu0 %v1247, 14
      %v1256 = vpop.permute.xlu0 %1255
      %vm1257 = vcmask 113664
      %v1258 = vsel %vm1257, %v1252, %v1254
      %v1259 = vsel %vm1257, %v1254, %v1256
      %v1262 = vsel %vm1146, %v1258, 0.0
      %v1263 = vsel %vm1147, %v1259, 0.0
      %1264 = vst [vmem:[#allocation6 + $0x90] sm:$0xff] %v1262
      %1265 = vst [vmem:[#allocation6 + $0x98] sm:$0xff] %v1263
      %v1266 = vld [vmem:[#allocation4] sm:$0xff]
      %v1267 = vld [vmem:[#allocation4 + $0x8] sm:$0xff]
      %v1268 = vld [vmem:[#allocation4 + $0x10] sm:$0xff]
      %1272 = vrot.lane.b32.xlu0 %v1266, 2
      %v1273 = vpop.permute.xlu0 %1272
      %1274 = vrot.lane.b32.xlu0 %v1267, 2
      %v1275 = vpop.permute.xlu0 %1274
      %1276 = vrot.lane.b32.xlu0 %v1268, 2
      %v1277 = vpop.permute.xlu0 %1276
      %vm1278 = vcmask 15360
      %v1279 = vsel %vm1278, %v1273, %v1275
      %v1280 = vsel %vm1278, %v1275, %v1277
      %v1283 = vsel %vm1053, %v1279, 0.0
      %v1284 = vsel %vm1054, %v1280, 0.0
      %1285 = vst [vmem:[#allocation6 + $0xa0] sm:$0xff] %v1283
      %1286 = vst [vmem:[#allocation6 + $0xa8] sm:$0xff] %v1284
      %v1287 = vld [vmem:[#allocation4] sm:$0xff]
      %v1288 = vld [vmem:[#allocation4 + $0x8] sm:$0xff]
      %v1289 = vld [vmem:[#allocation4 + $0x10] sm:$0xff]
      %1293 = vrot.lane.b32.xlu0 %v1287, 1
      %v1294 = vpop.permute.xlu0 %1293
      %1295 = vrot.lane.b32.xlu0 %v1288, 1
      %v1296 = vpop.permute.xlu0 %1295
      %1297 = vrot.lane.b32.xlu0 %v1289, 1
      %v1298 = vpop.permute.xlu0 %1297
      %v1299 = vsel %vm580, %v1294, %v1296
      %v1300 = vsel %vm580, %v1296, %v1298
      %v1303 = vsel %vm517, %v1299, 0.0
      %v1304 = vsel %vm518, %v1300, 0.0
      %1305 = vst [vmem:[#allocation6 + $0xb0] sm:$0xff] %v1303
      %1306 = vst [vmem:[#allocation6 + $0xb8] sm:$0xff] %v1304
      %v1307 = vld [vmem:[#allocation4 + $0x8] sm:$0xff]
      %v1308 = vld [vmem:[#allocation4 + $0x10] sm:$0xff]
      %1309 = vst [vmem:[#allocation6 + $0xc0] sm:$0xff] %v1307
      %1310 = vst [vmem:[#allocation6 + $0xc8] sm:$0xff] %v1308
      %v1311 = vld [vmem:[#allocation4 + $0x8] sm:$0xff]
      %v1312 = vld [vmem:[#allocation4 + $0x10] sm:$0xff]
      %v1313 = vld [vmem:[#allocation4 + $0x18] sm:$0xff]
      %1317 = vrot.lane.b32.xlu0 %v1311, 127
      %v1318 = vpop.permute.xlu0 %1317
      %1319 = vrot.lane.b32.xlu0 %v1312, 127
      %v1320 = vpop.permute.xlu0 %1319
      %1321 = vrot.lane.b32.xlu0 %v1313, 127
      %v1322 = vpop.permute.xlu0 %1321
      %v1323 = vsel %vm606, %v1318, %v1320
      %v1324 = vsel %vm606, %v1320, %v1322
      %v1327 = vsel %vm557, %v1323, 0.0
      %v1328 = vsel %vm558, %v1324, 0.0
      %1329 = vst [vmem:[#allocation6 + $0xd0] sm:$0xff] %v1327
      %1330 = vst [vmem:[#allocation6 + $0xd8] sm:$0xff] %v1328
      %v1331 = vld [vmem:[#allocation4 + $0x8] sm:$0xff]
      %v1332 = vld [vmem:[#allocation4 + $0x10] sm:$0xff]
      %v1333 = vld [vmem:[#allocation4 + $0x18] sm:$0xff]
      %1337 = vrot.lane.b32.xlu0 %v1331, 126
      %v1338 = vpop.permute.xlu0 %1337
      %1339 = vrot.lane.b32.xlu0 %v1332, 126
      %v1340 = vpop.permute.xlu0 %1339
      %1341 = vrot.lane.b32.xlu0 %v1333, 126
      %v1342 = vpop.permute.xlu0 %1341
      %vm1343 = vcmask 1031168
      %v1344 = vsel %vm1343, %v1338, %v1340
      %v1345 = vsel %vm1343, %v1340, %v1342
      %v1348 = vsel %vm1146, %v1344, 0.0
      %v1349 = vsel %vm1147, %v1345, 0.0
      %1350 = vst [vmem:[#allocation6 + $0xe0] sm:$0xff] %v1348
      %1351 = vst [vmem:[#allocation6 + $0xe8] sm:$0xff] %v1349
      %v1352 = vld [vmem:[#allocation4 + $0x8] sm:$0xff]
      %v1353 = vld [vmem:[#allocation4 + $0x10] sm:$0xff]
      %v1354 = vld [vmem:[#allocation4 + $0x18] sm:$0xff]
      %1358 = vrot.lane.b32.xlu0 %v1352, 114
      %v1359 = vpop.permute.xlu0 %1358
      %1360 = vrot.lane.b32.xlu0 %v1353, 114
      %v1361 = vpop.permute.xlu0 %1360
      %1362 = vrot.lane.b32.xlu0 %v1354, 114
      %v1363 = vpop.permute.xlu0 %1362
      %vm1364 = vcmask 932864
      %v1365 = vsel %vm1364, %v1359, %v1361
      %v1366 = vsel %vm1364, %v1361, %v1363
      %v1369 = vsel %vm1053, %v1365, 0.0
      %v1370 = vsel %vm1054, %v1366, 0.0
      %1371 = vst [vmem:[#allocation6 + $0xf0] sm:$0xff] %v1369
      %1372 = vst [vmem:[#allocation6 + $0xf8] sm:$0xff] %v1370
      %v1373 = vld [vmem:[#allocation4 + $0x8] sm:$0xff]
      %v1374 = vld [vmem:[#allocation4 + $0x10] sm:$0xff]
      %v1375 = vld [vmem:[#allocation4 + $0x18] sm:$0xff]
      %1379 = vrot.lane.b32.xlu0 %v1373, 113
      %v1380 = vpop.permute.xlu0 %1379
      %1381 = vrot.lane.b32.xlu0 %v1374, 113
      %v1382 = vpop.permute.xlu0 %1381
      %1383 = vrot.lane.b32.xlu0 %v1375, 113
      %v1384 = vpop.permute.xlu0 %1383
      %v1385 = vsel %vm621, %v1380, %v1382
      %v1386 = vsel %vm621, %v1382, %v1384
      %v1389 = vsel %vm517, %v1385, 0.0
      %v1390 = vsel %vm518, %v1386, 0.0
      %1391 = vst [vmem:[#allocation6 + $0x100] sm:$0xff] %v1389
      %1392 = vst [vmem:[#allocation6 + $0x108] sm:$0xff] %v1390
      %v1393 = vld [vmem:[#allocation4 + $0x8] sm:$0xff]
      %v1394 = vld [vmem:[#allocation4 + $0x10] sm:$0xff]
      %v1395 = vld [vmem:[#allocation4 + $0x18] sm:$0xff]
      %1399 = vrot.lane.b32.xlu0 %v1393, 112
      %v1400 = vpop.permute.xlu0 %1399
      %1401 = vrot.lane.b32.xlu0 %v1394, 112
      %v1402 = vpop.permute.xlu0 %1401
      %1403 = vrot.lane.b32.xlu0 %v1395, 112
      %v1404 = vpop.permute.xlu0 %1403
      %v1405 = vsel %vm636, %v1400, %v1402
      %v1406 = vsel %vm636, %v1402, %v1404
      %1409 = vst [vmem:[#allocation6 + $0x110] sm:$0xff] %v1405
      %1410 = vst [vmem:[#allocation6 + $0x118] sm:$0xff] %v1406
      %v1411 = vld [vmem:[#allocation4 + $0x8] sm:$0xff]
      %v1412 = vld [vmem:[#allocation4 + $0x10] sm:$0xff]
      %v1413 = vld [vmem:[#allocation4 + $0x18] sm:$0xff]
      %1417 = vrot.lane.b32.xlu0 %v1411, 111
      %v1418 = vpop.permute.xlu0 %1417
      %1419 = vrot.lane.b32.xlu0 %v1412, 111
      %v1420 = vpop.permute.xlu0 %1419
      %1421 = vrot.lane.b32.xlu0 %v1413, 111
      %v1422 = vpop.permute.xlu0 %1421
      %v1423 = vsel %vm649, %v1418, %v1420
      %v1424 = vsel %vm649, %v1420, %v1422
      %v1427 = vsel %vm557, %v1423, 0.0
      %v1428 = vsel %vm558, %v1424, 0.0
      %1429 = vst [vmem:[#allocation6 + $0x120] sm:$0xff] %v1427
      %1430 = vst [vmem:[#allocation6 + $0x128] sm:$0xff] %v1428
      %v1431 = vld [vmem:[#allocation4 + $0x8] sm:$0xff]
      %v1432 = vld [vmem:[#allocation4 + $0x10] sm:$0xff]
      %v1433 = vld [vmem:[#allocation4 + $0x18] sm:$0xff]
      %1437 = vrot.lane.b32.xlu0 %v1431, 110
      %v1438 = vpop.permute.xlu0 %1437
      %1439 = vrot.lane.b32.xlu0 %v1432, 110
      %v1440 = vpop.permute.xlu0 %1439
      %1441 = vrot.lane.b32.xlu0 %v1433, 110
      %v1442 = vpop.permute.xlu0 %1441
      %vm1443 = vcmask 900096
      %v1444 = vsel %vm1443, %v1438, %v1440
      %v1445 = vsel %vm1443, %v1440, %v1442
      %v1448 = vsel %vm1146, %v1444, 0.0
      %v1449 = vsel %vm1147, %v1445, 0.0
      %1450 = vst [vmem:[#allocation6 + $0x130] sm:$0xff] %v1448
      %1451 = vst [vmem:[#allocation6 + $0x138] sm:$0xff] %v1449
      %v1452 = vld [vmem:[#allocation4 + $0x8] sm:$0xff]
      %v1453 = vld [vmem:[#allocation4 + $0x10] sm:$0xff]
      %v1454 = vld [vmem:[#allocation4 + $0x18] sm:$0xff]
      %1458 = vrot.lane.b32.xlu0 %v1452, 98
      %v1459 = vpop.permute.xlu0 %1458
      %1460 = vrot.lane.b32.xlu0 %v1453, 98
      %v1461 = vpop.permute.xlu0 %1460
      %1462 = vrot.lane.b32.xlu0 %v1454, 98
      %v1463 = vpop.permute.xlu0 %1462
      %vm1464 = vcmask 801792
      %v1465 = vsel %vm1464, %v1459, %v1461
      %v1466 = vsel %vm1464, %v1461, %v1463
      %v1469 = vsel %vm1053, %v1465, 0.0
      %v1470 = vsel %vm1054, %v1466, 0.0
      %1471 = vst [vmem:[#allocation6 + $0x140] sm:$0xff] %v1469
      %1472 = vst [vmem:[#allocation6 + $0x148] sm:$0xff] %v1470
      %v1473 = vld [vmem:[#allocation4 + $0x8] sm:$0xff]
      %v1474 = vld [vmem:[#allocation4 + $0x10] sm:$0xff]
      %v1475 = vld [vmem:[#allocation4 + $0x18] sm:$0xff]
      %1479 = vrot.lane.b32.xlu0 %v1473, 97
      %v1480 = vpop.permute.xlu0 %1479
      %1481 = vrot.lane.b32.xlu0 %v1474, 97
      %v1482 = vpop.permute.xlu0 %1481
      %1483 = vrot.lane.b32.xlu0 %v1475, 97
      %v1484 = vpop.permute.xlu0 %1483
      %vm1485 = vcmask 793600
      %v1486 = vsel %vm1485, %v1480, %v1482
      %v1487 = vsel %vm1485, %v1482, %v1484
      %v1490 = vsel %vm517, %v1486, 0.0
      %v1491 = vsel %vm518, %v1487, 0.0
      %1492 = vst [vmem:[#allocation6 + $0x150] sm:$0xff] %v1490
      %1493 = vst [vmem:[#allocation6 + $0x158] sm:$0xff] %v1491
      %v1494 = vld [vmem:[#allocation4 + $0x8] sm:$0xff]
      %v1495 = vld [vmem:[#allocation4 + $0x10] sm:$0xff]
      %v1496 = vld [vmem:[#allocation4 + $0x18] sm:$0xff]
      %1500 = vrot.lane.b32.xlu0 %v1494, 96
      %v1501 = vpop.permute.xlu0 %1500
      %1502 = vrot.lane.b32.xlu0 %v1495, 96
      %v1503 = vpop.permute.xlu0 %1502
      %1504 = vrot.lane.b32.xlu0 %v1496, 96
      %v1505 = vpop.permute.xlu0 %1504
      %vm1506 = vcmask 785408
      %v1507 = vsel %vm1506, %v1501, %v1503
      %v1508 = vsel %vm1506, %v1503, %v1505
      %1511 = vst [vmem:[#allocation6 + $0x160] sm:$0xff] %v1507
      %1512 = vst [vmem:[#allocation6 + $0x168] sm:$0xff] %v1508
      %v1513 = vld [vmem:[#allocation4 + $0x8] sm:$0xff]
      %v1514 = vld [vmem:[#allocation4 + $0x10] sm:$0xff]
      %v1515 = vld [vmem:[#allocation4 + $0x18] sm:$0xff]
      %1519 = vrot.lane.b32.xlu0 %v1513, 95
      %v1520 = vpop.permute.xlu0 %1519
      %1521 = vrot.lane.b32.xlu0 %v1514, 95
      %v1522 = vpop.permute.xlu0 %1521
      %1523 = vrot.lane.b32.xlu0 %v1515, 95
      %v1524 = vpop.permute.xlu0 %1523
      %vm1525 = vcmask 777216
      %v1526 = vsel %vm1525, %v1520, %v1522
      %v1527 = vsel %vm1525, %v1522, %v1524
      %v1530 = vsel %vm557, %v1526, 0.0
      %v1531 = vsel %vm558, %v1527, 0.0
      %1532 = vst [vmem:[#allocation6 + $0x170] sm:$0xff] %v1530
      %1533 = vst [vmem:[#allocation6 + $0x178] sm:$0xff] %v1531
      %v1534 = vld [vmem:[#allocation4 + $0x8] sm:$0xff]
      %v1535 = vld [vmem:[#allocation4 + $0x10] sm:$0xff]
      %v1536 = vld [vmem:[#allocation4 + $0x18] sm:$0xff]
      %1540 = vrot.lane.b32.xlu0 %v1534, 94
      %v1541 = vpop.permute.xlu0 %1540
      %1542 = vrot.lane.b32.xlu0 %v1535, 94
      %v1543 = vpop.permute.xlu0 %1542
      %1544 = vrot.lane.b32.xlu0 %v1536, 94
      %v1545 = vpop.permute.xlu0 %1544
      %vm1546 = vcmask 769024
      %v1547 = vsel %vm1546, %v1541, %v1543
      %v1548 = vsel %vm1546, %v1543, %v1545
      %v1551 = vsel %vm1146, %v1547, 0.0
      %v1552 = vsel %vm1147, %v1548, 0.0
      %1553 = vst [vmem:[#allocation6 + $0x180] sm:$0xff] %v1551
      %1554 = vst [vmem:[#allocation6 + $0x188] sm:$0xff] %v1552
      %v1555 = vld [vmem:[%s8] sm:$0xff]
      %v1556 = vld [vmem:[%s8 + $0x8] sm:$0xff]
      %v1557 = vld [vmem:[#allocation6] sm:$0xff]
      %v1558 = vld [vmem:[#allocation6 + $0x8] sm:$0xff]
      %v1559 = vld [vmem:[#allocation6 + $0x10] sm:$0xff]
      %v1560 = vld [vmem:[#allocation6 + $0x18] sm:$0xff]
      %v1561 = vld [vmem:[#allocation6 + $0x20] sm:$0xff]
      %v1562 = vld [vmem:[#allocation6 + $0x28] sm:$0xff]
      %v1563 = vld [vmem:[#allocation6 + $0x30] sm:$0xff]
      %v1564 = vld [vmem:[#allocation6 + $0x38] sm:$0xff]
      %v1565 = vld [vmem:[#allocation6 + $0x40] sm:$0xff]
      %v1566 = vld [vmem:[#allocation6 + $0x48] sm:$0xff]
      %v1567 = vld [vmem:[#allocation6 + $0x50] sm:$0xff]
      %v1568 = vld [vmem:[#allocation6 + $0x58] sm:$0xff]
      %v1569 = vld [vmem:[#allocation6 + $0x60] sm:$0xff]
      %v1570 = vld [vmem:[#allocation6 + $0x68] sm:$0xff]
      %v1571 = vld [vmem:[#allocation6 + $0x70] sm:$0xff]
      %v1572 = vld [vmem:[#allocation6 + $0x78] sm:$0xff]
      %v1573 = vld [vmem:[#allocation6 + $0x80] sm:$0xff]
      %v1574 = vld [vmem:[#allocation6 + $0x88] sm:$0xff]
      %v1575 = vld [vmem:[#allocation6 + $0x90] sm:$0xff]
      %v1576 = vld [vmem:[#allocation6 + $0x98] sm:$0xff]
      %v1577 = vld [vmem:[#allocation6 + $0xa0] sm:$0xff]
      %v1578 = vld [vmem:[#allocation6 + $0xa8] sm:$0xff]
      %v1579 = vld [vmem:[#allocation6 + $0xb0] sm:$0xff]
      %v1580 = vld [vmem:[#allocation6 + $0xb8] sm:$0xff]
      %v1581 = vld [vmem:[#allocation6 + $0xc0] sm:$0xff]
      %v1582 = vld [vmem:[#allocation6 + $0xc8] sm:$0xff]
      %v1583 = vld [vmem:[#allocation6 + $0xd0] sm:$0xff]
      %v1584 = vld [vmem:[#allocation6 + $0xd8] sm:$0xff]
      %v1585 = vld [vmem:[#allocation6 + $0xe0] sm:$0xff]
      %v1586 = vld [vmem:[#allocation6 + $0xe8] sm:$0xff]
      %v1587 = vld [vmem:[#allocation6 + $0xf0] sm:$0xff]
      %v1588 = vld [vmem:[#allocation6 + $0xf8] sm:$0xff]
      %v1589 = vld [vmem:[#allocation6 + $0x100] sm:$0xff]
      %v1590 = vld [vmem:[#allocation6 + $0x108] sm:$0xff]
      %v1591 = vld [vmem:[#allocation6 + $0x110] sm:$0xff]
      %v1592 = vld [vmem:[#allocation6 + $0x118] sm:$0xff]
      %v1593 = vld [vmem:[#allocation6 + $0x120] sm:$0xff]
      %v1594 = vld [vmem:[#allocation6 + $0x128] sm:$0xff]
      %v1595 = vld [vmem:[#allocation6 + $0x130] sm:$0xff]
      %v1596 = vld [vmem:[#allocation6 + $0x138] sm:$0xff]
      %v1597 = vld [vmem:[#allocation6 + $0x140] sm:$0xff]
      %v1598 = vld [vmem:[#allocation6 + $0x148] sm:$0xff]
      %v1599 = vld [vmem:[#allocation6 + $0x150] sm:$0xff]
      %v1600 = vld [vmem:[#allocation6 + $0x158] sm:$0xff]
      %v1601 = vld [vmem:[#allocation6 + $0x160] sm:$0xff]
      %v1602 = vld [vmem:[#allocation6 + $0x168] sm:$0xff]
      %v1603 = vld [vmem:[#allocation6 + $0x170] sm:$0xff]
      %v1604 = vld [vmem:[#allocation6 + $0x178] sm:$0xff]
      %v1605 = vld [vmem:[#allocation6 + $0x180] sm:$0xff]
      %v1606 = vld [vmem:[#allocation6 + $0x188] sm:$0xff]
      %v1607 = vld [vmem:[%s9] sm:$0xff]
      %1609 = vset.pattern.permute.xlu0 0
      %1610 = vperm.xlu0 %1609, %v1607
      %v1611 = vpop.permute.xlu0 %1610
      %v1614 = vsel %vm945, %v1556, 0
      %1616 = vmatprep.subr.mxu0 %v1558
      %1617 = vmatpush1.msra.mxu0 %v1557
      %1618 = vmatprep.subr.mxu0 %v1560
      %1619 = vmatpush1.msra.mxu0 %v1559
      %1620 = vmatprep.subr.mxu0 %v1562
      %1621 = vmatpush1.msra.mxu0 %v1561
      %1622 = vmatprep.subr.mxu0 %v1564
      %1623 = vmatpush1.msra.mxu0 %v1563
      %1624 = vmatprep.subr.mxu0 %v1566
      %1625 = vmatpush1.msra.mxu0 %v1565
      %1626 = vmatprep.subr.mxu0 %v1568
      %1627 = vmatpush1.msra.mxu0 %v1567
      %1628 = vmatprep.subr.mxu0 %v1570
      %1629 = vmatpush1.msra.mxu0 %v1569
      %1630 = vmatprep.subr.mxu0 %v1572
      %1631 = vmatpush1.msra.mxu0 %v1571
      %1632 = vmatprep.subr.mxu0 %v1574
      %1633 = vmatpush1.msra.mxu0 %v1573
      %1634 = vmatprep.subr.mxu0 %v1576
      %1635 = vmatpush1.msra.mxu0 %v1575
      %1636 = vmatprep.subr.mxu0 %v1578
      %1637 = vmatpush1.msra.mxu0 %v1577
      %1638 = vmatprep.subr.mxu0 %v1580
      %1639 = vmatpush1.msra.mxu0 %v1579
      %1640 = vmatprep.subr.mxu0 %v1582
      %1641 = vmatpush1.msra.mxu0 %v1581
      %1642 = vmatprep.subr.mxu0 %v1584
      %1643 = vmatpush1.msra.mxu0 %v1583
      %1644 = vmatprep.subr.mxu0 %v1586
      %1645 = vmatpush1.msra.mxu0 %v1585
      %1646 = vmatprep.subr.mxu0 %v1588
      %1647 = vmatpush1.msra.mxu0 %v1587
      %1648 = vmatprep.subr.mxu0 %v1590
      %1649 = vmatpush1.msra.mxu0 %v1589
      %1650 = vmatprep.subr.mxu0 %v1592
      %1651 = vmatpush1.msra.mxu0 %v1591
      %1652 = vmatprep.subr.mxu0 %v1594
      %1653 = vmatpush1.msra.mxu0 %v1593
      %1654 = vmatprep.subr.mxu0 %v1596
      %1655 = vmatpush1.msra.mxu0 %v1595
      %1656 = vmatprep.subr.mxu0 %v1598
      %1657 = vmatpush1.msra.mxu0 %v1597
      %1658 = vmatprep.subr.mxu0 %v1600
      %1659 = vmatpush1.msra.mxu0 %v1599
      %1660 = vmatprep.subr.mxu0 %v1602
      %1661 = vmatpush1.msra.mxu0 %v1601
      %1662 = vmatprep.subr.mxu0 %v1604
      %1663 = vmatpush1.msra.mxu0 %v1603
      %1664 = vmatprep.subr.mxu0 %v1606
      %1665 = vmatpush1.msra.mxu0 %v1605
      %1666 = vmatprep.subr.mxu0 0.0
      %1667 = vmatpush1.msra.mxu0 0.0
      %1668 = vmatprep.subr.mxu0 0.0
      %1669 = vmatpush1.msra.mxu0 0.0
      %1670 = vmatprep.subr.mxu0 0.0
      %1671 = vmatpush1.msra.mxu0 0.0
      %1672 = vmatprep.subr.mxu0 0.0
      %1673 = vmatpush1.msra.mxu0 0.0
      %1674 = vmatprep.subr.mxu0 0.0
      %1675 = vmatpush1.msra.mxu0 0.0
      %1676 = vmatprep.subr.mxu0 0.0
      %1677 = vmatpush1.msra.mxu0 0.0
      %1678 = vmatprep.subr.mxu0 0.0
      %1679 = vmatpush1.msra.mxu0 0.0
      %1680 = vmatprep.mubr.f32.mxu0 %v1614
      %1681 = vmatmul.mubr.f32.gmra.mrb[0].mxu0 %v1555
      %v1682 = vpop.f32.mrb[0].mxu0
      %v1683 = vadd.f32 %v1611, %v1682
      %v1684 = vpop.f32.mrb[0].mxu0
      %v1685 = vadd.f32 %v1611, %v1684
      %1686 = vdwg.mxu0
      %v1687 = vmax.f32 %v1683, 0.0
      %v1688 = vmax.f32 %v1685, 0.0
      %1689 = vst [vmem:[%s359 + $0x30] sm:$0xff] %v1687
      %1690 = vst [vmem:[%s359 + $0x38] sm:$0xff] %v1688
      %p1691 = scmp.lt.s32.totalorder %s21, 1
      %s1692 = scalar_select %p1691, %s21, 1
      %s1693 = smul.addr %s1692, 10
      %s1694 = smul.addr %s1693, 8
      %s1695 = scalar_lea.vmem %s10, %s1694
      // Predicated region
      $region61: #{inception_block.1} parent=59 // pred_check
        %p1696 = pneg %p254
      $region62: #{inception_block.1} parent=59 // pred_check_branch
        %1698 = sbr.rel (%p1696) target = $region64
      $region63: #{inception_block.1} parent=59 // pred_region
        _
      $region64: #{inception_block.1} parent=59 // pred_fallthru
        _
    $region60: #{inception_block.1} parent=5 // pred_fallthru
      _
    %p1699 = scmp.le.s32.totalorder 2, %s16
    // Predicated region
    $region65: #{inception_block.1} parent=5 // pred_check
      %p1700 = pneg %p1699
    $region66: #{inception_block.1} parent=5 // pred_check_branch
      %1702 = sbr.rel (%p1700) target = $region68
    $region67: #{inception_block.1} parent=5 // pred_region
      %s1703 = ssub.s32 %s16, 2
      // Predicated region
      $region69: #{inception_block.1} parent=67 // pred_check
        %p1704 = pneg %p260
      $region70: #{inception_block.1} parent=67 // pred_check_branch
        %1706 = sbr.rel (%p1704) target = $region72
      $region71: #{inception_block.1} parent=67 // pred_region
        %p1707 = scmp.lt.s32.totalorder %s22, 1
        %s1708 = scalar_select %p1707, %s22, 1
        %s1709 = smul.addr %s1708, 10
        %s1710 = smul.addr %s1709, 8
        %s1711 = scalar_lea.vmem %s10, %s1710
      $region72: #{inception_block.1} parent=67 // pred_fallthru
        _
    $region68: #{inception_block.1} parent=5 // pred_fallthru
      _
  $region6: #{inception_block.1} parent=0 // loop_footer
    %s20 = sadd.s32 1, %s16
  $region7: #{inception_block.1} parent=0 // loop_footer_branch
    %15 = sbr.rel target = $region3
  $region8: #{inception_block.1} parent=0 // loop_exit
    _

</llo_original>
